<compile_context>
chip_gen: v5e
topology: v5e:2x2
jax: 0.10.0
libtpu: 0.0.40
codegen_flags: <defaults>
</compile_context>

<pallas_src>
import jax
import jax.numpy as jnp
from jax.experimental import pallas as pl
from jax.experimental.pallas import tpu as pltpu


def _round_up(x, m):
    return (x + m - 1) // m * m


def _make_head_kernel(num_feats):
    def kernel(*refs):
        feat_refs = refs[:num_feats]
        w1_refs = refs[num_feats:2 * num_feats]
        b1_ref, w2_ref, b2_ref, o_ref = refs[2 * num_feats:]

        # concat(feats) @ W1  ==  sum_e feat_e @ W1[rows_e]  (no VMEM concat).
        # bf16 operands on the MXU, f32 accumulation.
        h = jnp.dot(feat_refs[0][...], w1_refs[0][...],
                    preferred_element_type=jnp.float32)
        for e in range(1, num_feats):
            h = h + jnp.dot(feat_refs[e][...], w1_refs[e][...],
                            preferred_element_type=jnp.float32)

        # Bias + LeakyReLU(0.2) epilogue in f32 on the VPU.
        h = h + b1_ref[...]                      # (tb, hid) + (1, hid)
        h = jnp.maximum(h, 0.2 * h)              # leaky relu via max

        # Classifier (lane-padded to 128): bf16 operands, f32 accumulation.
        o = jnp.dot(h.astype(w2_ref.dtype), w2_ref[...],
                    preferred_element_type=jnp.float32)
        o_ref[...] = (o + b2_ref[...]).astype(o_ref.dtype)

    return kernel


def aggregate_feat_ensemble_head(feats, w1, b1, w2, b2, *, block_b=None):
    """Fused concat + Dropout(id) + Linear + LeakyReLU + Dropout(id) + Linear.

    feats: tuple of (B, f_e) per-component feature arrays (sum f_e = total_feat)
    w1: (total_feat, hidden)   b1: (hidden,)
    w2: (hidden, num_classes)  b2: (num_classes,)
    returns (B, num_classes) in the dtype of feats[0]
    """
    feats = tuple(feats)
    nf = len(feats)
    B = feats[0].shape[0]
    feat_lens = [f.shape[1] for f in feats]
    total_feat = sum(feat_lens)
    hid = w1.shape[1]
    num_classes = w2.shape[1]
    assert w1.shape[0] == total_feat and w2.shape[0] == hid
    assert b1.shape == (hid,) and b2.shape == (num_classes,)

    in_dtype = feats[0].dtype
    cdtype = jnp.bfloat16       # MXU operand dtype (halves HBM/VMEM traffic)
    out_dtype = jnp.bfloat16    # lane-dense writeback; sliced/cast in wrapper

    # Lane-dense classifier: pad N to exactly 128 (one MXU N-tile); zero
    # columns are mathematically exact, wrapper slices the real classes.
    out_pad = max(128, _round_up(num_classes, 128))
    w2p = jnp.zeros((hid, out_pad), cdtype).at[:, :num_classes].set(
        w2.astype(cdtype))
    b2p = jnp.zeros((1, out_pad), jnp.float32).at[0, :num_classes].set(
        b2.astype(jnp.float32))
    b1_2d = b1.astype(jnp.float32).reshape(1, hid)

    # Pre-slice W1 rows per component (zero-cost at trace time).
    offs = [0]
    for fl in feat_lens:
        offs.append(offs[-1] + fl)
    w1_slices = [w1[offs[e]:offs[e + 1], :].astype(cdtype) for e in range(nf)]

    # Batch tiling: big tiles amortize per-step overhead, keep >=2 grid steps
    # when possible, cap at 512 rows; zero-pad ragged batches.
    if block_b is None:
        b8 = _round_up(B, 8)
        if b8 <= 8:
            block_b = b8
        else:
            n_target = max(2, pl.cdiv(b8, 512))
            block_b = _round_up(pl.cdiv(b8, n_target), 8)
    else:
        block_b = _round_up(min(block_b, _round_up(B, 8)), 8)
    Bp = _round_up(max(B, block_b), block_b)
    n_steps = Bp // block_b

    feats_p = []
    for f in feats:
        fb = f.astype(cdtype)
        if Bp != B:
            fb = jnp.pad(fb, ((0, Bp - B), (0, 0)))
        feats_p.append(fb)

    # v7x megacore: only split the batch across the two TensorCores when the
    # per-core activation traffic outweighs the duplicated resident weights.
    weight_stream_bytes = (total_feat * hid + hid * out_pad) * 2
    act_stream_bytes = Bp * total_feat * 2
    use_parallel = n_steps >= 4 and (act_stream_bytes // 2) > weight_stream_bytes
    semantics = ("parallel",) if use_parallel else ("arbitrary",)

    flops = 2 * Bp * (total_feat * hid + hid * out_pad)
    bytes_accessed = (act_stream_bytes + weight_stream_bytes
                      + (hid + out_pad) * 4 + Bp * out_pad * 2)

    feat_specs = [pl.BlockSpec((block_b, fl), lambda i: (i, 0))
                  for fl in feat_lens]

    def _const_spec(shape, single_buffer):
        # Never-changing blocks: constant index_map keeps them VMEM-resident;
        # a single buffer halves their footprint (important on v7x's 64 MiB).
        if single_buffer:
            return pl.BlockSpec(shape, lambda i: (0, 0),
                                pipeline_mode=pl.Buffered(1))
        return pl.BlockSpec(shape, lambda i: (0, 0))

    def _vmem_limit(single_buffer):
        wbytes = weight_stream_bytes + (hid + out_pad) * 4
        wmult = 1 if single_buffer else 2
        act = 2 * block_b * total_feat * 2        # double-buffered feat tiles
        outb = 2 * block_b * out_pad * 2          # double-buffered out tile
        scratch = block_b * (hid + out_pad) * 4   # f32 intermediates
        need = wmult * wbytes + act + outb + scratch
        return int(min(max(2 * need + (4 << 20), 32 << 20), 64 << 20))

    def _run(single_buffer_weights):
        in_specs = list(feat_specs)
        in_specs += [_const_spec(w.shape, single_buffer_weights)
                     for w in w1_slices]
        in_specs += [
            _const_spec(b1_2d.shape, single_buffer_weights),
            _const_spec(w2p.shape, single_buffer_weights),
            _const_spec(b2p.shape, single_buffer_weights),
        ]
        return pl.pallas_call(
            _make_head_kernel(nf),
            out_shape=jax.ShapeDtypeStruct((Bp, out_pad), out_dtype),
            grid=(n_steps,),
            in_specs=in_specs,
            out_specs=pl.BlockSpec((block_b, out_pad), lambda i: (i, 0)),
            compiler_params=pltpu.CompilerParams(
                dimension_semantics=semantics,
                vmem_limit_bytes=_vmem_limit(single_buffer_weights)),
            cost_estimate=pl.CostEstimate(
                flops=flops, transcendentals=0, bytes_accessed=bytes_accessed),
        )(*feats_p, *w1_slices, b1_2d, w2p, b2p)

    try:
        out = _run(True)
    except Exception:
        # pl.Buffered(1) / pipeline_mode not accepted by this JAX build:
        # fall back to default double-buffered resident weights.
        out = _run(False)

    return out[:B, :num_classes].astype(in_dtype)


if __name__ == "__main__":
    # Small shapes consistent with the module: 2 ensemble components producing
    # 96- and 160-dim features (total_feat_len=256), hidden_len=256 (module
    # default), num_classes=10, ragged batch=200 (exercises batch padding).
    B, feat_lens, hid, num_classes = 200, (96, 160), 256, 10
    total_feat = sum(feat_lens)

    key = jax.random.PRNGKey(0)
    kf1, kf2, kw1, kb1, kw2, kb2 = jax.random.split(key, 6)

    # Component sub-model outputs (the feats fed to the aggregation head).
    feats = (
        jax.random.normal(kf1, (B, feat_lens[0]), jnp.float32),
        jax.random.normal(kf2, (B, feat_lens[1]), jnp.float32),
    )
    w1 = jax.random.normal(kw1, (total_feat, hid), jnp.float32) * 0.05
    b1 = jax.random.normal(kb1, (hid,), jnp.float32) * 0.05
    w2 = jax.random.normal(kw2, (hid, num_classes), jnp.float32) * 0.05
    b2 = jax.random.normal(kb2, (num_classes,), jnp.float32) * 0.05

    out = aggregate_feat_ensemble_head(feats, w1, b1, w2, b2)
    out = jax.block_until_ready(out)

    # Pure-f32 reference (inference-mode Dropout = identity).
    x = jnp.concatenate(feats, axis=1)
    h = jnp.dot(x, w1, precision=jax.lax.Precision.HIGHEST) + b1
    h = jnp.where(h > 0, h, 0.2 * h)
    ref = jnp.dot(h, w2, precision=jax.lax.Precision.HIGHEST) + b2

    assert out.shape == (B, num_classes)
    max_err = float(jnp.max(jnp.abs(out - ref)))
    # bf16 MXU operands + bf16 writeback vs f32/HIGHEST reference.
    assert jnp.allclose(out, ref, atol=6e-2, rtol=6e-2), max_err

    print("KERNEL_OK")
</pallas_src>

<mosaic_0001>
module attributes {stable_mosaic.version = 11 : i64} {
  func.func @kernel(%arg0: i32, %arg1: memref<104x96xbf16, #tpu.memory_space<vmem>>, %arg2: memref<104x160xbf16, #tpu.memory_space<vmem>>, %arg3: memref<96x256xbf16, #tpu.memory_space<vmem>>, %arg4: memref<160x256xbf16, #tpu.memory_space<vmem>>, %arg5: memref<1x256xf32, #tpu.memory_space<vmem>>, %arg6: memref<256x128xbf16, #tpu.memory_space<vmem>>, %arg7: memref<1x128xf32, #tpu.memory_space<vmem>>, %arg8: memref<104x128xbf16, #tpu.memory_space<vmem>>) attributes {dimension_semantics = [#tpu.dimension_semantics<arbitrary>], iteration_bounds = array<i64: 2>, scalar_prefetch = 0 : i64, scratch_operands = 0 : i64, tpu.core_type = #tpu.core_type<tc>, window_params = [{transform_indices = @transform_0, window_bounds = array<i64: 104, 96>}, {transform_indices = @transform_1, window_bounds = array<i64: 104, 160>}, {pipeline_mode = #tpu.pipeline_mode<synchronous>, transform_indices = @transform_2, window_bounds = array<i64: 96, 256>}, {pipeline_mode = #tpu.pipeline_mode<synchronous>, transform_indices = @transform_3, window_bounds = array<i64: 160, 256>}, {pipeline_mode = #tpu.pipeline_mode<synchronous>, transform_indices = @transform_4, window_bounds = array<i64: 1, 256>}, {pipeline_mode = #tpu.pipeline_mode<synchronous>, transform_indices = @transform_5, window_bounds = array<i64: 256, 128>}, {pipeline_mode = #tpu.pipeline_mode<synchronous>, transform_indices = @transform_6, window_bounds = array<i64: 1, 128>}, {transform_indices = @transform_7, window_bounds = array<i64: 104, 128>}]} {
    %c0 = arith.constant 0 : index
    %c0_0 = arith.constant 0 : index
    %0 = vector.load %arg1[%c0, %c0_0] : memref<104x96xbf16, #tpu.memory_space<vmem>>, vector<104x96xbf16>
    %c0_1 = arith.constant 0 : index
    %c0_2 = arith.constant 0 : index
    %1 = vector.load %arg3[%c0_1, %c0_2] : memref<96x256xbf16, #tpu.memory_space<vmem>>, vector<96x256xbf16>
    %cst = arith.constant dense<0.000000e+00> : vector<104x256xf32>
    %2 = tpu.matmul %0, %1, %cst {dimension_numbers = #tpu.dot_dimension_numbers<[1], [0], [0], [1], [0, 0, 1, 1], [], []>} : vector<104x96xbf16>, vector<96x256xbf16>, vector<104x256xf32> -> vector<104x256xf32>
    %c0_3 = arith.constant 0 : index
    %c0_4 = arith.constant 0 : index
    %3 = vector.load %arg2[%c0_3, %c0_4] : memref<104x160xbf16, #tpu.memory_space<vmem>>, vector<104x160xbf16>
    %c0_5 = arith.constant 0 : index
    %c0_6 = arith.constant 0 : index
    %4 = vector.load %arg4[%c0_5, %c0_6] : memref<160x256xbf16, #tpu.memory_space<vmem>>, vector<160x256xbf16>
    %cst_7 = arith.constant dense<0.000000e+00> : vector<104x256xf32>
    %5 = tpu.matmul %3, %4, %cst_7 {dimension_numbers = #tpu.dot_dimension_numbers<[1], [0], [0], [1], [0, 0, 1, 1], [], []>} : vector<104x160xbf16>, vector<160x256xbf16>, vector<104x256xf32> -> vector<104x256xf32>
    %6 = arith.addf %2, %5 : vector<104x256xf32>
    %c0_8 = arith.constant 0 : index
    %c0_9 = arith.constant 0 : index
    %7 = vector.load %arg5[%c0_8, %c0_9] : memref<1x256xf32, #tpu.memory_space<vmem>>, vector<1x256xf32>
    %8 = vector.broadcast %7 : vector<1x256xf32> to vector<104x256xf32>
    %9 = arith.addf %6, %8 : vector<104x256xf32>
    %cst_10 = arith.constant 2.000000e-01 : f32
    %10 = vector.broadcast %cst_10 : f32 to vector<104x256xf32>
    %11 = arith.mulf %10, %9 : vector<104x256xf32>
    %12 = arith.maximumf %9, %11 : vector<104x256xf32>
    %13 = arith.truncf %12 : vector<104x256xf32> to vector<104x256xbf16>
    %c0_11 = arith.constant 0 : index
    %c0_12 = arith.constant 0 : index
    %14 = vector.load %arg6[%c0_11, %c0_12] : memref<256x128xbf16, #tpu.memory_space<vmem>>, vector<256x128xbf16>
    %cst_13 = arith.constant dense<0.000000e+00> : vector<104x128xf32>
    %15 = tpu.matmul %13, %14, %cst_13 {dimension_numbers = #tpu.dot_dimension_numbers<[1], [0], [0], [1], [0, 0, 1, 1], [], []>} : vector<104x256xbf16>, vector<256x128xbf16>, vector<104x128xf32> -> vector<104x128xf32>
    %c0_14 = arith.constant 0 : index
    %c0_15 = arith.constant 0 : index
    %16 = vector.load %arg7[%c0_14, %c0_15] : memref<1x128xf32, #tpu.memory_space<vmem>>, vector<1x128xf32>
    %17 = vector.broadcast %16 : vector<1x128xf32> to vector<104x128xf32>
    %18 = arith.addf %15, %17 : vector<104x128xf32>
    %19 = arith.truncf %18 : vector<104x128xf32> to vector<104x128xbf16>
    %c0_16 = arith.constant 0 : index
    %c0_17 = arith.constant 0 : index
    %20 = vector.load %arg8[%c0_16, %c0_17] : memref<104x128xbf16, #tpu.memory_space<vmem>>, vector<104x128xbf16>
    tpu.vector_store %arg8[%c0_16, %c0_17], %19 {strides = array<i32>} : memref<104x128xbf16, #tpu.memory_space<vmem>>, vector<104x128xbf16>,
    return
  }
  func.func @transform_0(%arg0: i32) -> (i32, i32) {
    %c0_i32 = arith.constant 0 : i32
    %c0_i32_0 = arith.constant 0 : i32
    return %arg0, %c0_i32 : i32, i32
  }
  func.func @transform_1(%arg0: i32) -> (i32, i32) {
    %c0_i32 = arith.constant 0 : i32
    %c0_i32_0 = arith.constant 0 : i32
    return %arg0, %c0_i32 : i32, i32
  }
  func.func @transform_2(%arg0: i32) -> (i32, i32) {
    %c0_i32 = arith.constant 0 : i32
    %c0_i32_0 = arith.constant 0 : i32
    %c0_i32_1 = arith.constant 0 : i32
    return %c0_i32, %c0_i32_0 : i32, i32
  }
  func.func @transform_3(%arg0: i32) -> (i32, i32) {
    %c0_i32 = arith.constant 0 : i32
    %c0_i32_0 = arith.constant 0 : i32
    %c0_i32_1 = arith.constant 0 : i32
    return %c0_i32, %c0_i32_0 : i32, i32
  }
  func.func @transform_4(%arg0: i32) -> (i32, i32) {
    %c0_i32 = arith.constant 0 : i32
    %c0_i32_0 = arith.constant 0 : i32
    %c0_i32_1 = arith.constant 0 : i32
    return %c0_i32, %c0_i32_0 : i32, i32
  }
  func.func @transform_5(%arg0: i32) -> (i32, i32) {
    %c0_i32 = arith.constant 0 : i32
    %c0_i32_0 = arith.constant 0 : i32
    %c0_i32_1 = arith.constant 0 : i32
    return %c0_i32, %c0_i32_0 : i32, i32
  }
  func.func @transform_6(%arg0: i32) -> (i32, i32) {
    %c0_i32 = arith.constant 0 : i32
    %c0_i32_0 = arith.constant 0 : i32
    %c0_i32_1 = arith.constant 0 : i32
    return %c0_i32, %c0_i32_0 : i32, i32
  }
  func.func @transform_7(%arg0: i32) -> (i32, i32) {
    %c0_i32 = arith.constant 0 : i32
    %c0_i32_0 = arith.constant 0 : i32
    return %arg0, %c0_i32 : i32, i32
  }
}

module attributes {stable_mosaic.version = 11 : i64} {
  func.func @kernel(%arg0: i32, %arg1: memref<104x96xbf16, #tpu.memory_space<vmem>>, %arg2: memref<104x160xbf16, #tpu.memory_space<vmem>>, %arg3: memref<96x256xbf16, #tpu.memory_space<vmem>>, %arg4: memref<160x256xbf16, #tpu.memory_space<vmem>>, %arg5: memref<1x256xf32, #tpu.memory_space<vmem>>, %arg6: memref<256x128xbf16, #tpu.memory_space<vmem>>, %arg7: memref<1x128xf32, #tpu.memory_space<vmem>>, %arg8: memref<104x128xbf16, #tpu.memory_space<vmem>>) attributes {dimension_semantics = [#tpu.dimension_semantics<arbitrary>], iteration_bounds = array<i64: 2>, scalar_prefetch = 0 : i64, scratch_operands = 0 : i64, tpu.core_type = #tpu.core_type<tc>, window_params = [{transform_indices = @transform_0, window_bounds = array<i64: 104, 96>}, {transform_indices = @transform_1, window_bounds = array<i64: 104, 160>}, {pipeline_mode = #tpu.pipeline_mode<synchronous>, transform_indices = @transform_2, window_bounds = array<i64: 96, 256>}, {pipeline_mode = #tpu.pipeline_mode<synchronous>, transform_indices = @transform_3, window_bounds = array<i64: 160, 256>}, {pipeline_mode = #tpu.pipeline_mode<synchronous>, transform_indices = @transform_4, window_bounds = array<i64: 1, 256>}, {pipeline_mode = #tpu.pipeline_mode<synchronous>, transform_indices = @transform_5, window_bounds = array<i64: 256, 128>}, {pipeline_mode = #tpu.pipeline_mode<synchronous>, transform_indices = @transform_6, window_bounds = array<i64: 1, 128>}, {transform_indices = @transform_7, window_bounds = array<i64: 104, 128>}]} {
    %c0 = arith.constant 0 : index
    %c0_0 = arith.constant 0 : index
    %0 = vector.load %arg1[%c0, %c0_0] : memref<104x96xbf16, #tpu.memory_space<vmem>>, vector<104x96xbf16>
    %c0_1 = arith.constant 0 : index
    %c0_2 = arith.constant 0 : index
    %1 = vector.load %arg3[%c0_1, %c0_2] : memref<96x256xbf16, #tpu.memory_space<vmem>>, vector<96x256xbf16>
    %cst = arith.constant dense<0.000000e+00> : vector<104x256xf32>
    %2 = tpu.matmul %0, %1, %cst {dimension_numbers = #tpu.dot_dimension_numbers<[1], [0], [0], [1], [0, 0, 1, 1], [], []>} : vector<104x96xbf16>, vector<96x256xbf16>, vector<104x256xf32> -> vector<104x256xf32>
    %c0_3 = arith.constant 0 : index
    %c0_4 = arith.constant 0 : index
    %3 = vector.load %arg2[%c0_3, %c0_4] : memref<104x160xbf16, #tpu.memory_space<vmem>>, vector<104x160xbf16>
    %c0_5 = arith.constant 0 : index
    %c0_6 = arith.constant 0 : index
    %4 = vector.load %arg4[%c0_5, %c0_6] : memref<160x256xbf16, #tpu.memory_space<vmem>>, vector<160x256xbf16>
    %cst_7 = arith.constant dense<0.000000e+00> : vector<104x256xf32>
    %5 = tpu.matmul %3, %4, %cst_7 {dimension_numbers = #tpu.dot_dimension_numbers<[1], [0], [0], [1], [0, 0, 1, 1], [], []>} : vector<104x160xbf16>, vector<160x256xbf16>, vector<104x256xf32> -> vector<104x256xf32>
    %6 = arith.addf %2, %5 : vector<104x256xf32>
    %c0_8 = arith.constant 0 : index
    %c0_9 = arith.constant 0 : index
    %7 = vector.load %arg5[%c0_8, %c0_9] : memref<1x256xf32, #tpu.memory_space<vmem>>, vector<1x256xf32>
    %8 = vector.broadcast %7 : vector<1x256xf32> to vector<104x256xf32>
    %9 = arith.addf %6, %8 : vector<104x256xf32>
    %cst_10 = arith.constant 2.000000e-01 : f32
    %10 = vector.broadcast %cst_10 : f32 to vector<104x256xf32>
    %11 = arith.mulf %10, %9 : vector<104x256xf32>
    %12 = arith.maximumf %9, %11 : vector<104x256xf32>
    %13 = arith.truncf %12 : vector<104x256xf32> to vector<104x256xbf16>
    %c0_11 = arith.constant 0 : index
    %c0_12 = arith.constant 0 : index
    %14 = vector.load %arg6[%c0_11, %c0_12] : memref<256x128xbf16, #tpu.memory_space<vmem>>, vector<256x128xbf16>
    %cst_13 = arith.constant dense<0.000000e+00> : vector<104x128xf32>
    %15 = tpu.matmul %13, %14, %cst_13 {dimension_numbers = #tpu.dot_dimension_numbers<[1], [0], [0], [1], [0, 0, 1, 1], [], []>} : vector<104x256xbf16>, vector<256x128xbf16>, vector<104x128xf32> -> vector<104x128xf32>
    %c0_14 = arith.constant 0 : index
    %c0_15 = arith.constant 0 : index
    %16 = vector.load %arg7[%c0_14, %c0_15] : memref<1x128xf32, #tpu.memory_space<vmem>>, vector<1x128xf32>
    %17 = vector.broadcast %16 : vector<1x128xf32> to vector<104x128xf32>
    %18 = arith.addf %15, %17 : vector<104x128xf32>
    %19 = arith.truncf %18 : vector<104x128xf32> to vector<104x128xbf16>
    %c0_16 = arith.constant 0 : index
    %c0_17 = arith.constant 0 : index
    %20 = vector.load %arg8[%c0_16, %c0_17] : memref<104x128xbf16, #tpu.memory_space<vmem>>, vector<104x128xbf16>
    tpu.vector_store %arg8[%c0_16, %c0_17], %19 {strides = array<i32>} : memref<104x128xbf16, #tpu.memory_space<vmem>>, vector<104x128xbf16>,
    return
  }
  func.func @transform_0(%arg0: i32) -> (i32, i32) {
    %c0_i32 = arith.constant 0 : i32
    %c0_i32_0 = arith.constant 0 : i32
    return %arg0, %c0_i32 : i32, i32
  }
  func.func @transform_1(%arg0: i32) -> (i32, i32) {
    %c0_i32 = arith.constant 0 : i32
    %c0_i32_0 = arith.constant 0 : i32
    return %arg0, %c0_i32 : i32, i32
  }
  func.func @transform_2(%arg0: i32) -> (i32, i32) {
    %c0_i32 = arith.constant 0 : i32
    %c0_i32_0 = arith.constant 0 : i32
    %c0_i32_1 = arith.constant 0 : i32
    return %c0_i32, %c0_i32_0 : i32, i32
  }
  func.func @transform_3(%arg0: i32) -> (i32, i32) {
    %c0_i32 = arith.constant 0 : i32
    %c0_i32_0 = arith.constant 0 : i32
    %c0_i32_1 = arith.constant 0 : i32
    return %c0_i32, %c0_i32_0 : i32, i32
  }
  func.func @transform_4(%arg0: i32) -> (i32, i32) {
    %c0_i32 = arith.constant 0 : i32
    %c0_i32_0 = arith.constant 0 : i32
    %c0_i32_1 = arith.constant 0 : i32
    return %c0_i32, %c0_i32_0 : i32, i32
  }
  func.func @transform_5(%arg0: i32) -> (i32, i32) {
    %c0_i32 = arith.constant 0 : i32
    %c0_i32_0 = arith.constant 0 : i32
    %c0_i32_1 = arith.constant 0 : i32
    return %c0_i32, %c0_i32_0 : i32, i32
  }
  func.func @transform_6(%arg0: i32) -> (i32, i32) {
    %c0_i32 = arith.constant 0 : i32
    %c0_i32_0 = arith.constant 0 : i32
    %c0_i32_1 = arith.constant 0 : i32
    return %c0_i32, %c0_i32_0 : i32, i32
  }
  func.func @transform_7(%arg0: i32) -> (i32, i32) {
    %c0_i32 = arith.constant 0 : i32
    %c0_i32_0 = arith.constant 0 : i32
    return %arg0, %c0_i32 : i32, i32
  }
}

</mosaic_0001>

<llo_original>
// kernel: tpu_custom_call.1
$region0: #{tpu_custom_call.1}
  #allocation0 [shape = 'u32[]', space=smem, size = 0x4, offset = 0x4, fixed_abs, tag = 'smem constant byte address 0x4 - core index']
  #allocation1 [shape = 'u32[72,128]{1,0:T(1,128)}', space=vmem, size = 0x9000, scoped, tag = 'internal scratch']
  %s0 = inlined_call_operand.vmem [shape: bf16[208,96], index: 0, kind: input, shape index: {}]
  %s1 = inlined_call_operand.vmem [shape: bf16[208,160], index: 1, kind: input, shape index: {}]
  %s2 = inlined_call_operand.vmem [shape: bf16[96,256], index: 2, kind: input, shape index: {}]
  %s3 = inlined_call_operand.vmem [shape: bf16[160,256], index: 3, kind: input, shape index: {}]
  %s4 = inlined_call_operand.vmem [shape: f32[1,256], index: 4, kind: input, shape index: {}]
  %s5 = inlined_call_operand.vmem [shape: bf16[256,128], index: 5, kind: input, shape index: {}]
  %s6 = inlined_call_operand.vmem [shape: f32[1,128], index: 6, kind: input, shape index: {}]
  %s7 = inlined_call_operand.hbm [shape: bf16[208,128], index: 7, kind: output, shape index: {}]
  %s8 = sld [smem:[#allocation0]]
  $region61: #{tpu_custom_call.1} parent=0
    _
  %s10 = ssub.s32 1, %s8
  %s11 = scalar_select 0, %s10, %s8
  $region1: #{tpu_custom_call.1} parent=0
    #allocation2 [shape = 'u8[53248]{0}', space=vmem, size = 0xd000, scoped, tag = 'output window, operand 0']
    #allocation3 [shape = 's32[2]{0}', space=sflag, size = 0x8, scoped, tag = 'scoped memory for tpu_custom_call.1']
    %12 = vsyncpa [#allocation3], 0
    %s13 = scalar_lea.sflag [#allocation3], 1
    %14 = vsyncpa %s13, 0
    loop: start=0, step=1, limit=4
    $region2: #{tpu_custom_call.1} parent=1 // loop_pre_header
      _
    $region3: #{tpu_custom_call.1} parent=1 // loop_header
      %s16 = sphi 0, %s20
      %p17 = scmp.ge.s32.totalorder %s16, 4
      %s26 = sphi 0, %s28
      %s29 = sphi 0, %s26
      %s30 = sphi 0, %s29
      %s46 = sphi 0, %s30
      %s52 = sphi 0, %s54
      %s55 = sphi 0, %s52
      %s56 = sphi 0, %s55
      %s72 = sphi 0, %s56
      %s76 = sphi 0, %s76
      %s78 = sphi 0, %s76
      %s79 = sphi 0, %s78
      %s93 = sphi 0, %s79
      %s97 = sphi 0, %s97
      %s99 = sphi 0, %s97
      %s100 = sphi 0, %s99
      %s114 = sphi 0, %s100
      %s118 = sphi 0, %s118
      %s120 = sphi 0, %s118
      %s121 = sphi 0, %s120
      %s135 = sphi 0, %s121
      %s139 = sphi 0, %s139
      %s141 = sphi 0, %s139
      %s142 = sphi 0, %s141
      %s156 = sphi 0, %s142
      %s160 = sphi 0, %s160
      %s162 = sphi 0, %s160
      %s163 = sphi 0, %s162
      %s177 = sphi 0, %s163
      %s183 = sphi 0, %s185
      %s186 = sphi 0, %s183
      %s187 = sphi 0, %s186
      %s203 = sphi 0, %s187
    $region4: #{tpu_custom_call.1} parent=1 // loop_header_branch
      %19 = sbr.rel (%p17) target = $region8
    $region5: #{tpu_custom_call.1} parent=1 // loop_body
      %s21 = ssub.s32 %s16, 1
      %s22 = ssub.s32 %s16, 2
      %s23 = sadd.s32 %s16, 1
      %s24 = ssub.s32 %s16, %s23
      %p25 = scmp.eq.s32.totalorder %s24, 0
      %s27 = sadd.s32 %s26, 1
      %s28 = scalar_select %p25, %s26, %s27
      %p31 = pneg %p25
      %p32 = scmp.eq.s32.totalorder %s16, 1
      %p33 = por %p31, %p32
      %p34 = scmp.ne.s32.totalorder %s26, %s29
      %p35 = scmp.eq.s32.totalorder %s16, 0
      %p36 = por %p34, %p35
      %p37 = scmp.ne.s32.totalorder %s26, %s29
      %p38 = scmp.eq.s32.totalorder %s21, 1
      %p39 = por %p37, %p38
      %p40 = scmp.ne.s32.totalorder %s29, %s30
      %p41 = scmp.eq.s32.totalorder %s21, 0
      %p42 = por %p40, %p41
      %p43 = scmp.ne.s32.totalorder %s29, %s30
      %p44 = scmp.eq.s32.totalorder %s22, 1
      %p45 = por %p43, %p44
      %p47 = scmp.ne.s32.totalorder %s30, %s46
      %p48 = scmp.eq.s32.totalorder %s22, 0
      %p49 = por %p47, %p48
      %s50 = ssub.s32 %s16, %s23
      %p51 = scmp.eq.s32.totalorder %s50, 0
      %s53 = sadd.s32 %s52, 1
      %s54 = scalar_select %p51, %s52, %s53
      %p57 = pneg %p51
      %p58 = scmp.eq.s32.totalorder %s16, 1
      %p59 = por %p57, %p58
      %p60 = scmp.ne.s32.totalorder %s52, %s55
      %p61 = scmp.eq.s32.totalorder %s16, 0
      %p62 = por %p60, %p61
      %p63 = scmp.ne.s32.totalorder %s52, %s55
      %p64 = scmp.eq.s32.totalorder %s21, 1
      %p65 = por %p63, %p64
      %p66 = scmp.ne.s32.totalorder %s55, %s56
      %p67 = scmp.eq.s32.totalorder %s21, 0
      %p68 = por %p66, %p67
      %p69 = scmp.ne.s32.totalorder %s55, %s56
      %p70 = scmp.eq.s32.totalorder %s22, 1
      %p71 = por %p69, %p70
      %p73 = scmp.ne.s32.totalorder %s56, %s72
      %p74 = scmp.eq.s32.totalorder %s22, 0
      %p75 = por %p73, %p74
      %s77 = sadd.s32 %s76, 1
      %p80 = scmp.eq.s32.totalorder %s16, 1
      %p81 = scmp.ne.s32.totalorder %s76, %s78
      %p82 = scmp.eq.s32.totalorder %s16, 0
      %p83 = por %p81, %p82
      %p84 = scmp.ne.s32.totalorder %s76, %s78
      %p85 = scmp.eq.s32.totalorder %s21, 1
      %p86 = por %p84, %p85
      %p87 = scmp.ne.s32.totalorder %s78, %s79
      %p88 = scmp.eq.s32.totalorder %s21, 0
      %p89 = por %p87, %p88
      %p90 = scmp.ne.s32.totalorder %s78, %s79
      %p91 = scmp.eq.s32.totalorder %s22, 1
      %p92 = por %p90, %p91
      %p94 = scmp.ne.s32.totalorder %s79, %s93
      %p95 = scmp.eq.s32.totalorder %s22, 0
      %p96 = por %p94, %p95
      %s98 = sadd.s32 %s97, 1
      %p101 = scmp.eq.s32.totalorder %s16, 1
      %p102 = scmp.ne.s32.totalorder %s97, %s99
      %p103 = scmp.eq.s32.totalorder %s16, 0
      %p104 = por %p102, %p103
      %p105 = scmp.ne.s32.totalorder %s97, %s99
      %p106 = scmp.eq.s32.totalorder %s21, 1
      %p107 = por %p105, %p106
      %p108 = scmp.ne.s32.totalorder %s99, %s100
      %p109 = scmp.eq.s32.totalorder %s21, 0
      %p110 = por %p108, %p109
      %p111 = scmp.ne.s32.totalorder %s99, %s100
      %p112 = scmp.eq.s32.totalorder %s22, 1
      %p113 = por %p111, %p112
      %p115 = scmp.ne.s32.totalorder %s100, %s114
      %p116 = scmp.eq.s32.totalorder %s22, 0
      %p117 = por %p115, %p116
      %s119 = sadd.s32 %s118, 1
      %p122 = scmp.eq.s32.totalorder %s16, 1
      %p123 = scmp.ne.s32.totalorder %s118, %s120
      %p124 = scmp.eq.s32.totalorder %s16, 0
      %p125 = por %p123, %p124
      %p126 = scmp.ne.s32.totalorder %s118, %s120
      %p127 = scmp.eq.s32.totalorder %s21, 1
      %p128 = por %p126, %p127
      %p129 = scmp.ne.s32.totalorder %s120, %s121
      %p130 = scmp.eq.s32.totalorder %s21, 0
      %p131 = por %p129, %p130
      %p132 = scmp.ne.s32.totalorder %s120, %s121
      %p133 = scmp.eq.s32.totalorder %s22, 1
      %p134 = por %p132, %p133
      %p136 = scmp.ne.s32.totalorder %s121, %s135
      %p137 = scmp.eq.s32.totalorder %s22, 0
      %p138 = por %p136, %p137
      %s140 = sadd.s32 %s139, 1
      %p143 = scmp.eq.s32.totalorder %s16, 1
      %p144 = scmp.ne.s32.totalorder %s139, %s141
      %p145 = scmp.eq.s32.totalorder %s16, 0
      %p146 = por %p144, %p145
      %p147 = scmp.ne.s32.totalorder %s139, %s141
      %p148 = scmp.eq.s32.totalorder %s21, 1
      %p149 = por %p147, %p148
      %p150 = scmp.ne.s32.totalorder %s141, %s142
      %p151 = scmp.eq.s32.totalorder %s21, 0
      %p152 = por %p150, %p151
      %p153 = scmp.ne.s32.totalorder %s141, %s142
      %p154 = scmp.eq.s32.totalorder %s22, 1
      %p155 = por %p153, %p154
      %p157 = scmp.ne.s32.totalorder %s142, %s156
      %p158 = scmp.eq.s32.totalorder %s22, 0
      %p159 = por %p157, %p158
      %s161 = sadd.s32 %s160, 1
      %p164 = scmp.eq.s32.totalorder %s16, 1
      %p165 = scmp.ne.s32.totalorder %s160, %s162
      %p166 = scmp.eq.s32.totalorder %s16, 0
      %p167 = por %p165, %p166
      %p168 = scmp.ne.s32.totalorder %s160, %s162
      %p169 = scmp.eq.s32.totalorder %s21, 1
      %p170 = por %p168, %p169
      %p171 = scmp.ne.s32.totalorder %s162, %s163
      %p172 = scmp.eq.s32.totalorder %s21, 0
      %p173 = por %p171, %p172
      %p174 = scmp.ne.s32.totalorder %s162, %s163
      %p175 = scmp.eq.s32.totalorder %s22, 1
      %p176 = por %p174, %p175
      %p178 = scmp.ne.s32.totalorder %s163, %s177
      %p179 = scmp.eq.s32.totalorder %s22, 0
      %p180 = por %p178, %p179
      %s181 = ssub.s32 %s16, %s23
      %p182 = scmp.eq.s32.totalorder %s181, 0
      %s184 = sadd.s32 %s183, 1
      %s185 = scalar_select %p182, %s183, %s184
      %p188 = pneg %p182
      %p189 = scmp.eq.s32.totalorder %s16, 1
      %p190 = por %p188, %p189
      %p191 = scmp.ne.s32.totalorder %s183, %s186
      %p192 = scmp.eq.s32.totalorder %s16, 0
      %p193 = por %p191, %p192
      %p194 = scmp.ne.s32.totalorder %s183, %s186
      %p195 = scmp.eq.s32.totalorder %s21, 1
      %p196 = por %p194, %p195
      %p197 = scmp.ne.s32.totalorder %s186, %s187
      %p198 = scmp.eq.s32.totalorder %s21, 0
      %p199 = por %p197, %p198
      %p200 = scmp.ne.s32.totalorder %s186, %s187
      %p201 = scmp.eq.s32.totalorder %s22, 1
      %p202 = por %p200, %p201
      %p204 = scmp.ne.s32.totalorder %s187, %s203
      %p205 = scmp.eq.s32.totalorder %s22, 0
      %p206 = por %p204, %p205
      %p207 = scmp.le.s32.totalorder 1, %s16
      %p208 = scmp.lt.s32.totalorder %s16, 3
      %p209 = pnand %p207, %p208
      %p210 = pneg %p209
      // Predicated region
      $region9: #{tpu_custom_call.1} parent=5 // pred_check
        _
      $region10: #{tpu_custom_call.1} parent=5 // pred_check_branch
        %212 = sbr.rel (%p209) target = $region12
      $region11: #{tpu_custom_call.1} parent=5 // pred_region
        %s213 = ssub.s32 %s16, 1
        // Predicated region
        $region13: #{tpu_custom_call.1} parent=11 // pred_check
          %p214 = pneg %p89
        $region14: #{tpu_custom_call.1} parent=11 // pred_check_branch
          %216 = sbr.rel (%p214) target = $region16
        $region15: #{tpu_custom_call.1} parent=11 // pred_region
          _
        $region16: #{tpu_custom_call.1} parent=11 // pred_fallthru
          _
        // Predicated region
        $region17: #{tpu_custom_call.1} parent=11 // pred_check
          %p217 = pneg %p110
        $region18: #{tpu_custom_call.1} parent=11 // pred_check_branch
          %219 = sbr.rel (%p217) target = $region20
        $region19: #{tpu_custom_call.1} parent=11 // pred_region
          _
        $region20: #{tpu_custom_call.1} parent=11 // pred_fallthru
          _
        // Predicated region
        $region21: #{tpu_custom_call.1} parent=11 // pred_check
          %p220 = pneg %p131
        $region22: #{tpu_custom_call.1} parent=11 // pred_check_branch
          %222 = sbr.rel (%p220) target = $region24
        $region23: #{tpu_custom_call.1} parent=11 // pred_region
          _
        $region24: #{tpu_custom_call.1} parent=11 // pred_fallthru
          _
        // Predicated region
        $region25: #{tpu_custom_call.1} parent=11 // pred_check
          %p223 = pneg %p152
        $region26: #{tpu_custom_call.1} parent=11 // pred_check_branch
          %225 = sbr.rel (%p223) target = $region28
        $region27: #{tpu_custom_call.1} parent=11 // pred_region
          _
        $region28: #{tpu_custom_call.1} parent=11 // pred_fallthru
          _
        // Predicated region
        $region29: #{tpu_custom_call.1} parent=11 // pred_check
          %p226 = pneg %p173
        $region30: #{tpu_custom_call.1} parent=11 // pred_check_branch
          %228 = sbr.rel (%p226) target = $region32
        $region31: #{tpu_custom_call.1} parent=11 // pred_region
          _
        $region32: #{tpu_custom_call.1} parent=11 // pred_fallthru
          _
      $region12: #{tpu_custom_call.1} parent=5 // pred_fallthru
        _
      %p229 = scmp.lt.s32.totalorder %s16, 2
      // Predicated region
      $region33: #{tpu_custom_call.1} parent=5 // pred_check
        %p230 = pneg %p229
      $region34: #{tpu_custom_call.1} parent=5 // pred_check_branch
        %232 = sbr.rel (%p230) target = $region36
      $region35: #{tpu_custom_call.1} parent=5 // pred_region
        // Predicated region
        $region37: #{tpu_custom_call.1} parent=35 // pred_check
          %p233 = pneg %p36
        $region38: #{tpu_custom_call.1} parent=35 // pred_check_branch
          %235 = sbr.rel (%p233) target = $region40
        $region39: #{tpu_custom_call.1} parent=35 // pred_region
          %s236 = smul.u32 13, %s16
          %p237 = scmp.lt.s32.totalorder %s236, 25
          %s238 = scalar_select %p237, %s236, 25
          %s239 = smul.addr %s238, 4
          %s240 = scalar_lea.vmem %s0, %s239
          %s241 = smul.u32 13, %s16
        $region40: #{tpu_custom_call.1} parent=35 // pred_fallthru
          _
        // Predicated region
        $region41: #{tpu_custom_call.1} parent=35 // pred_check
          %p242 = pneg %p62
        $region42: #{tpu_custom_call.1} parent=35 // pred_check_branch
          %244 = sbr.rel (%p242) target = $region44
        $region43: #{tpu_custom_call.1} parent=35 // pred_region
          %s245 = smul.u32 13, %s16
          %p246 = scmp.lt.s32.totalorder %s245, 25
          %s247 = scalar_select %p246, %s245, 25
          %s248 = smul.addr %s247, 2
          %s249 = smul.addr %s248, 4
          %s250 = scalar_lea.vmem %s1, %s249
          %s251 = smul.u32 13, %s16
        $region44: #{tpu_custom_call.1} parent=35 // pred_fallthru
          _
      $region36: #{tpu_custom_call.1} parent=5 // pred_fallthru
        _
      %p252 = scmp.le.s32.totalorder 1, %s16
      %p253 = scmp.lt.s32.totalorder %s16, 3
      %p254 = pnand %p252, %p253
      %p255 = pneg %p254
      // Predicated region
      $region45: #{tpu_custom_call.1} parent=5 // pred_check
        _
      $region46: #{tpu_custom_call.1} parent=5 // pred_check_branch
        %257 = sbr.rel (%p254) target = $region48
      $region47: #{tpu_custom_call.1} parent=5 // pred_region
        %s258 = ssub.s32 %s16, 1
        %s259 = smul.u32 13, %s21
        %p260 = scmp.lt.s32.totalorder %s259, 25
        %s261 = scalar_select %p260, %s259, 25
        %s262 = smul.addr %s261, 4
        %s263 = scalar_lea.vmem %s0, %s262
        %p264 = pneg %p42
        %p265 = pneg %p39
        %s266 = smul.u32 13, %s21
        %p267 = scmp.lt.s32.totalorder %s266, 25
        %s268 = scalar_select %p267, %s266, 25
        %s269 = smul.addr %s268, 2
        %s270 = smul.addr %s269, 4
        %s271 = scalar_lea.vmem %s1, %s270
        %p272 = pneg %p68
        %p273 = pneg %p65
        %p274 = pneg %p89
        %p275 = pneg %p86
        %p276 = pneg %p110
        %p277 = pneg %p107
        %p278 = pneg %p131
        %p279 = pneg %p128
        %p280 = pneg %p152
        %p281 = pneg %p149
        %p282 = pneg %p173
        %p283 = pneg %p170
        %p284 = pneg %p199
        %p285 = pneg %p196
        %s286 = sand.u32 %s186, 1
        %s287 = scalar_lea.sflag [#allocation3], %s286
        %s288 = sand.u32 %s186, 1
        %s289 = smul.addr %s288, 52
        %s290 = scalar_lea.vmem [#allocation2], %s289
        %s291 = smul.u32 13, %s21
        %p292 = scmp.lt.s32.totalorder %s291, 25
        %s293 = scalar_select %p292, %s291, 25
        %s294 = smul.addr %s293, 4
        %s295 = scalar_lea.vmem %s0, %s294
        %s296 = smul.u32 13, %s21
        %s297 = smul.u32 13, %s21
        %p298 = scmp.lt.s32.totalorder %s297, 25
        %s299 = scalar_select %p298, %s297, 25
        %s300 = smul.addr %s299, 2
        %s301 = smul.addr %s300, 4
        %s302 = scalar_lea.vmem %s1, %s301
        %s303 = smul.u32 13, %s21
        %s304 = smul.u32 13, %s21
        %v306 = vld [vmem:[%s295] sm:$0xf]
        %v307 = vld [vmem:[%s295 + $0x4] sm:$0xf]
        %v308 = vld [vmem:[%s295 + $0x8] sm:$0xf]
        %v309 = vld [vmem:[%s295 + $0xc] sm:$0xf]
        %v310 = vld [vmem:[%s295 + $0x10] sm:$0xf]
        %v311 = vld [vmem:[%s295 + $0x14] sm:$0xf]
        %v312 = vld [vmem:[%s295 + $0x18] sm:$0xf]
        %v313 = vld [vmem:[%s295 + $0x1c] sm:$0xf]
        %v314 = vld [vmem:[%s295 + $0x20] sm:$0xf]
        %v315 = vld [vmem:[%s295 + $0x24] sm:$0xf]
        %v316 = vld [vmem:[%s295 + $0x28] sm:$0xf]
        %v317 = vld [vmem:[%s295 + $0x2c] sm:$0xf]
        %v318 = vld [vmem:[%s295 + $0x30] sm:$0xf]
        %v319 = vld [vmem:[%s2] sm:$0xff]
        %v320 = vld [vmem:[%s2 + $0x8] sm:$0xff]
        %v321 = vld [vmem:[%s2 + $0x10] sm:$0xff]
        %v322 = vld [vmem:[%s2 + $0x18] sm:$0xff]
        %v323 = vld [vmem:[%s2 + $0x20] sm:$0xff]
        %v324 = vld [vmem:[%s2 + $0x28] sm:$0xff]
        %v325 = vld [vmem:[%s2 + $0x30] sm:$0xff]
        %v326 = vld [vmem:[%s2 + $0x38] sm:$0xff]
        %v327 = vld [vmem:[%s2 + $0x40] sm:$0xff]
        %v328 = vld [vmem:[%s2 + $0x48] sm:$0xff]
        %v329 = vld [vmem:[%s2 + $0x50] sm:$0xff]
        %v330 = vld [vmem:[%s2 + $0x58] sm:$0xff]
        %v331 = vld [vmem:[%s302] sm:$0xff]
        %v332 = vld [vmem:[%s302 + $0x8] sm:$0xff]
        %v333 = vld [vmem:[%s302 + $0x10] sm:$0xff]
        %v334 = vld [vmem:[%s302 + $0x18] sm:$0xff]
        %v335 = vld [vmem:[%s302 + $0x20] sm:$0xff]
        %v336 = vld [vmem:[%s302 + $0x28] sm:$0xff]
        %v337 = vld [vmem:[%s302 + $0x30] sm:$0xff]
        %v338 = vld [vmem:[%s302 + $0x38] sm:$0xff]
        %v339 = vld [vmem:[%s302 + $0x40] sm:$0xff]
        %v340 = vld [vmem:[%s302 + $0x48] sm:$0xff]
        %v341 = vld [vmem:[%s302 + $0x50] sm:$0xff]
        %v342 = vld [vmem:[%s302 + $0x58] sm:$0xff]
        %v343 = vld [vmem:[%s302 + $0x60] sm:$0xff]
        %v344 = vld [vmem:[%s3] sm:$0xff]
        %v345 = vld [vmem:[%s3 + $0x8] sm:$0xff]
        %v346 = vld [vmem:[%s3 + $0x10] sm:$0xff]
        %v347 = vld [vmem:[%s3 + $0x18] sm:$0xff]
        %v348 = vld [vmem:[%s3 + $0x20] sm:$0xff]
        %v349 = vld [vmem:[%s3 + $0x28] sm:$0xff]
        %v350 = vld [vmem:[%s3 + $0x30] sm:$0xff]
        %v351 = vld [vmem:[%s3 + $0x38] sm:$0xff]
        %v352 = vld [vmem:[%s3 + $0x40] sm:$0xff]
        %v353 = vld [vmem:[%s3 + $0x48] sm:$0xff]
        %v354 = vld [vmem:[%s3 + $0x50] sm:$0xff]
        %v355 = vld [vmem:[%s3 + $0x58] sm:$0xff]
        %v356 = vld [vmem:[%s3 + $0x60] sm:$0xff]
        %v357 = vld [vmem:[%s3 + $0x68] sm:$0xff]
        %v358 = vld [vmem:[%s3 + $0x70] sm:$0xff]
        %v359 = vld [vmem:[%s3 + $0x78] sm:$0xff]
        %v360 = vld [vmem:[%s3 + $0x80] sm:$0xff]
        %v361 = vld [vmem:[%s3 + $0x88] sm:$0xff]
        %v362 = vld [vmem:[%s3 + $0x90] sm:$0xff]
        %v363 = vld [vmem:[%s3 + $0x98] sm:$0xff]
        %v377 = vunpack.c.l.b16 %v331
        %v378 = vunpack.c.h.b16 %v331
        %v379 = vunpack.c.l.b16 %v332
        %v380 = vunpack.c.h.b16 %v332
        %v381 = vunpack.c.l.b16 %v333
        %v382 = vunpack.c.h.b16 %v333
        %v383 = vunpack.c.l.b16 %v334
        %v384 = vunpack.c.h.b16 %v334
        %v385 = vunpack.c.l.b16 %v335
        %v386 = vunpack.c.h.b16 %v335
        %v387 = vunpack.c.l.b16 %v336
        %v388 = vunpack.c.h.b16 %v336
        %v389 = vunpack.c.l.b16 %v337
        %v390 = vunpack.c.h.b16 %v337
        %v391 = vunpack.c.l.b16 %v338
        %v392 = vunpack.c.h.b16 %v338
        %v393 = vunpack.c.l.b16 %v339
        %v394 = vunpack.c.h.b16 %v339
        %v395 = vunpack.c.l.b16 %v340
        %v396 = vunpack.c.h.b16 %v340
        %v397 = vunpack.c.l.b16 %v341
        %v398 = vunpack.c.h.b16 %v341
        %v399 = vunpack.c.l.b16 %v342
        %v400 = vunpack.c.h.b16 %v342
        %v401 = vunpack.c.l.b16 %v343
        %v402 = vunpack.c.h.b16 %v343
        %v403 = vpack.c.b16 %v379, %v377
        %v404 = vpack.c.b16 %v380, %v378
        %v405 = vpack.c.b16 %v383, %v381
        %v406 = vpack.c.b16 %v384, %v382
        %v407 = vpack.c.b16 %v387, %v385
        %v408 = vpack.c.b16 %v388, %v386
        %v409 = vpack.c.b16 %v391, %v389
        %v410 = vpack.c.b16 %v392, %v390
        %v411 = vpack.c.b16 %v395, %v393
        %v412 = vpack.c.b16 %v396, %v394
        %v413 = vpack.c.b16 %v399, %v397
        %v414 = vpack.c.b16 %v400, %v398
        %v415 = vpack.c.b16 %v401, %v401
        %v416 = vpack.c.b16 %v402, %v402
        %v444 = vunpack.c.l.b16 %v344
        %v445 = vunpack.c.h.b16 %v344
        %v446 = vunpack.c.l.b16 %v345
        %v447 = vunpack.c.h.b16 %v345
        %v448 = vunpack.c.l.b16 %v346
        %v449 = vunpack.c.h.b16 %v346
        %v450 = vunpack.c.l.b16 %v347
        %v451 = vunpack.c.h.b16 %v347
        %v452 = vunpack.c.l.b16 %v348
        %v453 = vunpack.c.h.b16 %v348
        %v454 = vunpack.c.l.b16 %v349
        %v455 = vunpack.c.h.b16 %v349
        %v456 = vunpack.c.l.b16 %v350
        %v457 = vunpack.c.h.b16 %v350
        %v458 = vunpack.c.l.b16 %v351
        %v459 = vunpack.c.h.b16 %v351
        %v460 = vunpack.c.l.b16 %v352
        %v461 = vunpack.c.h.b16 %v352
        %v462 = vunpack.c.l.b16 %v353
        %v463 = vunpack.c.h.b16 %v353
        %v464 = vunpack.c.l.b16 %v354
        %v465 = vunpack.c.h.b16 %v354
        %v466 = vunpack.c.l.b16 %v355
        %v467 = vunpack.c.h.b16 %v355
        %v468 = vunpack.c.l.b16 %v356
        %v469 = vunpack.c.h.b16 %v356
        %v470 = vunpack.c.l.b16 %v357
        %v471 = vunpack.c.h.b16 %v357
        %v472 = vunpack.c.l.b16 %v358
        %v473 = vunpack.c.h.b16 %v358
        %v474 = vunpack.c.l.b16 %v359
        %v475 = vunpack.c.h.b16 %v359
        %v476 = vunpack.c.l.b16 %v360
        %v477 = vunpack.c.h.b16 %v360
        %v478 = vunpack.c.l.b16 %v361
        %v479 = vunpack.c.h.b16 %v361
        %v480 = vunpack.c.l.b16 %v362
        %v481 = vunpack.c.h.b16 %v362
        %v482 = vunpack.c.l.b16 %v363
        %v483 = vunpack.c.h.b16 %v363
        %v484 = vpack.c.b16 %v446, %v444
        %v485 = vpack.c.b16 %v447, %v445
        %v486 = vpack.c.b16 %v450, %v448
        %v487 = vpack.c.b16 %v451, %v449
        %v488 = vpack.c.b16 %v454, %v452
        %v489 = vpack.c.b16 %v455, %v453
        %v490 = vpack.c.b16 %v458, %v456
        %v491 = vpack.c.b16 %v459, %v457
        %v492 = vpack.c.b16 %v462, %v460
        %v493 = vpack.c.b16 %v463, %v461
        %v494 = vpack.c.b16 %v466, %v464
        %v495 = vpack.c.b16 %v467, %v465
        %v496 = vpack.c.b16 %v470, %v468
        %v497 = vpack.c.b16 %v471, %v469
        %v498 = vpack.c.b16 %v474, %v472
        %v499 = vpack.c.b16 %v475, %v473
        %v500 = vpack.c.b16 %v478, %v476
        %v501 = vpack.c.b16 %v479, %v477
        %v502 = vpack.c.b16 %v482, %v480
        %v503 = vpack.c.b16 %v483, %v481
        %vm524 = vcmask 261120
        %v526 = vsel %vm524, %v404, 0
        %v529 = vsel %vm524, %v406, 0
        %v532 = vsel %vm524, %v408, 0
        %v535 = vsel %vm524, %v410, 0
        %v538 = vsel %vm524, %v412, 0
        %v541 = vsel %vm524, %v414, 0
        %v544 = vsel %vm524, %v416, 0
        %546 = vmatpush.bf16.msra.mxu0 %v498
        %547 = vmatpush.bf16.msra.mxu0 %v496
        %548 = vmatpush.bf16.msra.mxu0 %v494
        %549 = vmatpush.bf16.msra.mxu0 %v492
        %550 = vmatpush.bf16.msra.mxu0 %v490
        %551 = vmatpush.bf16.msra.mxu0 %v488
        %552 = vmatpush.bf16.msra.mxu0 %v486
        %553 = vmatpush.bf16.msra.mxu0 %v484
        %554 = vmatmul.bf16.gmra.mxu0 %v403
        %v555 = vpop.f32.mrf.mxu0
        %v556 = vadd.f32 0.0, %v555
        %v557 = vpop.f32.mrf.mxu0
        %v558 = vadd.f32 0.0, %v557
        %559 = vmatmul.bf16.gmra.mxu0 %v405
        %v560 = vpop.f32.mrf.mxu0
        %v561 = vadd.f32 0.0, %v560
        %v562 = vpop.f32.mrf.mxu0
        %v563 = vadd.f32 0.0, %v562
        %564 = vmatmul.bf16.gmra.mxu0 %v407
        %v565 = vpop.f32.mrf.mxu0
        %v566 = vadd.f32 0.0, %v565
        %v567 = vpop.f32.mrf.mxu0
        %v568 = vadd.f32 0.0, %v567
        %569 = vmatmul.bf16.gmra.mxu0 %v409
        %v570 = vpop.f32.mrf.mxu0
        %v571 = vadd.f32 0.0, %v570
        %v572 = vpop.f32.mrf.mxu0
        %v573 = vadd.f32 0.0, %v572
        %574 = vmatmul.bf16.gmra.mxu0 %v411
        %v575 = vpop.f32.mrf.mxu0
        %v576 = vadd.f32 0.0, %v575
        %v577 = vpop.f32.mrf.mxu0
        %v578 = vadd.f32 0.0, %v577
        %579 = vmatmul.bf16.gmra.mxu0 %v413
        %v580 = vpop.f32.mrf.mxu0
        %v581 = vadd.f32 0.0, %v580
        %v582 = vpop.f32.mrf.mxu0
        %v583 = vadd.f32 0.0, %v582
        %584 = vmatmul.bf16.gmra.mxu0 %v415
        %v585 = vpop.f32.mrf.mxu0
        %v586 = vadd.f32 0.0, %v585
        %v587 = vpop.f32.mrf.mxu0
        %588 = vdwg.mxu0
        %589 = vmatpush.bf16.msra.mxu0 0
        %590 = vmatpush.bf16.msra.mxu0 0
        %591 = vmatpush.bf16.msra.mxu0 0
        %592 = vmatpush.bf16.msra.mxu0 0
        %593 = vmatpush.bf16.msra.mxu0 0
        %594 = vmatpush.bf16.msra.mxu0 0
        %595 = vmatpush.bf16.msra.mxu0 %v502
        %596 = vmatpush.bf16.msra.mxu0 %v500
        %597 = vmatmul.bf16.gmra.mxu0 %v526
        %v598 = vpop.f32.mrf.mxu0
        %v599 = vadd.f32 %v556, %v598
        %v600 = vpop.f32.mrf.mxu0
        %v601 = vadd.f32 %v558, %v600
        %602 = vmatmul.bf16.gmra.mxu0 %v529
        %v603 = vpop.f32.mrf.mxu0
        %v604 = vadd.f32 %v561, %v603
        %v605 = vpop.f32.mrf.mxu0
        %v606 = vadd.f32 %v563, %v605
        %607 = vmatmul.bf16.gmra.mxu0 %v532
        %v608 = vpop.f32.mrf.mxu0
        %v609 = vadd.f32 %v566, %v608
        %v610 = vpop.f32.mrf.mxu0
        %v611 = vadd.f32 %v568, %v610
        %612 = vmatmul.bf16.gmra.mxu0 %v535
        %v613 = vpop.f32.mrf.mxu0
        %v614 = vadd.f32 %v571, %v613
        %v615 = vpop.f32.mrf.mxu0
        %v616 = vadd.f32 %v573, %v615
        %617 = vmatmul.bf16.gmra.mxu0 %v538
        %v618 = vpop.f32.mrf.mxu0
        %v619 = vadd.f32 %v576, %v618
        %v620 = vpop.f32.mrf.mxu0
        %v621 = vadd.f32 %v578, %v620
        %622 = vmatmul.bf16.gmra.mxu0 %v541
        %v623 = vpop.f32.mrf.mxu0
        %v624 = vadd.f32 %v581, %v623
        %v625 = vpop.f32.mrf.mxu0
        %v626 = vadd.f32 %v583, %v625
        %627 = vmatmul.bf16.gmra.mxu0 %v544
        %v628 = vpop.f32.mrf.mxu0
        %v629 = vadd.f32 %v586, %v628
        %v630 = vpop.f32.mrf.mxu0
        %631 = vdwg.mxu0
        %632 = vmatpush.bf16.msra.mxu0 %v499
        %633 = vmatpush.bf16.msra.mxu0 %v497
        %634 = vmatpush.bf16.msra.mxu0 %v495
        %635 = vmatpush.bf16.msra.mxu0 %v493
        %636 = vmatpush.bf16.msra.mxu0 %v491
        %637 = vmatpush.bf16.msra.mxu0 %v489
        %638 = vmatpush.bf16.msra.mxu0 %v487
        %639 = vmatpush.bf16.msra.mxu0 %v485
        %640 = vmatmul.bf16.gmra.mxu0 %v403
        %v641 = vpop.f32.mrf.mxu0
        %v642 = vadd.f32 0.0, %v641
        %v643 = vpop.f32.mrf.mxu0
        %v644 = vadd.f32 0.0, %v643
        %645 = vmatmul.bf16.gmra.mxu0 %v405
        %v646 = vpop.f32.mrf.mxu0
        %v647 = vadd.f32 0.0, %v646
        %v648 = vpop.f32.mrf.mxu0
        %v649 = vadd.f32 0.0, %v648
        %650 = vmatmul.bf16.gmra.mxu0 %v407
        %v651 = vpop.f32.mrf.mxu0
        %v652 = vadd.f32 0.0, %v651
        %v653 = vpop.f32.mrf.mxu0
        %v654 = vadd.f32 0.0, %v653
        %655 = vmatmul.bf16.gmra.mxu0 %v409
        %v656 = vpop.f32.mrf.mxu0
        %v657 = vadd.f32 0.0, %v656
        %v658 = vpop.f32.mrf.mxu0
        %v659 = vadd.f32 0.0, %v658
        %660 = vmatmul.bf16.gmra.mxu0 %v411
        %v661 = vpop.f32.mrf.mxu0
        %v662 = vadd.f32 0.0, %v661
        %v663 = vpop.f32.mrf.mxu0
        %v664 = vadd.f32 0.0, %v663
        %665 = vmatmul.bf16.gmra.mxu0 %v413
        %v666 = vpop.f32.mrf.mxu0
        %v667 = vadd.f32 0.0, %v666
        %v668 = vpop.f32.mrf.mxu0
        %v669 = vadd.f32 0.0, %v668
        %670 = vmatmul.bf16.gmra.mxu0 %v415
        %v671 = vpop.f32.mrf.mxu0
        %v672 = vadd.f32 0.0, %v671
        %v673 = vpop.f32.mrf.mxu0
        %674 = vdwg.mxu0
        %675 = vmatpush.bf16.msra.mxu0 0
        %676 = vmatpush.bf16.msra.mxu0 0
        %677 = vmatpush.bf16.msra.mxu0 0
        %678 = vmatpush.bf16.msra.mxu0 0
        %679 = vmatpush.bf16.msra.mxu0 0
        %680 = vmatpush.bf16.msra.mxu0 0
        %681 = vmatpush.bf16.msra.mxu0 %v503
        %682 = vmatpush.bf16.msra.mxu0 %v501
        %683 = vmatmul.bf16.gmra.mxu0 %v526
        %v684 = vpop.f32.mrf.mxu0
        %v685 = vadd.f32 %v642, %v684
        %v686 = vpop.f32.mrf.mxu0
        %v687 = vadd.f32 %v644, %v686
        %688 = vmatmul.bf16.gmra.mxu0 %v529
        %v689 = vpop.f32.mrf.mxu0
        %v690 = vadd.f32 %v647, %v689
        %v691 = vpop.f32.mrf.mxu0
        %v692 = vadd.f32 %v649, %v691
        %693 = vmatmul.bf16.gmra.mxu0 %v532
        %v694 = vpop.f32.mrf.mxu0
        %v695 = vadd.f32 %v652, %v694
        %v696 = vpop.f32.mrf.mxu0
        %v697 = vadd.f32 %v654, %v696
        %698 = vmatmul.bf16.gmra.mxu0 %v535
        %v699 = vpop.f32.mrf.mxu0
        %v700 = vadd.f32 %v657, %v699
        %v701 = vpop.f32.mrf.mxu0
        %v702 = vadd.f32 %v659, %v701
        %703 = vmatmul.bf16.gmra.mxu0 %v538
        %v704 = vpop.f32.mrf.mxu0
        %v705 = vadd.f32 %v662, %v704
        %v706 = vpop.f32.mrf.mxu0
        %v707 = vadd.f32 %v664, %v706
        %708 = vmatmul.bf16.gmra.mxu0 %v541
        %v709 = vpop.f32.mrf.mxu0
        %v710 = vadd.f32 %v667, %v709
        %v711 = vpop.f32.mrf.mxu0
        %v712 = vadd.f32 %v669, %v711
        %713 = vmatmul.bf16.gmra.mxu0 %v544
        %v714 = vpop.f32.mrf.mxu0
        %v715 = vadd.f32 %v672, %v714
        %v716 = vpop.f32.mrf.mxu0
        %717 = vdwg.mxu0
        %v731 = vunpack.c.l.b16 %v306
        %v732 = vunpack.c.l.b16 %v307
        %v733 = vunpack.c.l.b16 %v308
        %v734 = vunpack.c.l.b16 %v309
        %v735 = vunpack.c.l.b16 %v310
        %v736 = vunpack.c.l.b16 %v311
        %v737 = vunpack.c.l.b16 %v312
        %v738 = vunpack.c.l.b16 %v313
        %v739 = vunpack.c.l.b16 %v314
        %v740 = vunpack.c.l.b16 %v315
        %v741 = vunpack.c.l.b16 %v316
        %v742 = vunpack.c.l.b16 %v317
        %v743 = vunpack.c.l.b16 %v318
        %v744 = vpack.c.b16 %v732, %v731
        %v745 = vpack.c.b16 %v734, %v733
        %v746 = vpack.c.b16 %v736, %v735
        %v747 = vpack.c.b16 %v738, %v737
        %v748 = vpack.c.b16 %v740, %v739
        %v749 = vpack.c.b16 %v742, %v741
        %v750 = vpack.c.b16 %v743, %v743
        %v763 = vunpack.c.l.b16 %v319
        %v764 = vunpack.c.h.b16 %v319
        %v765 = vunpack.c.l.b16 %v320
        %v766 = vunpack.c.h.b16 %v320
        %v767 = vunpack.c.l.b16 %v321
        %v768 = vunpack.c.h.b16 %v321
        %v769 = vunpack.c.l.b16 %v322
        %v770 = vunpack.c.h.b16 %v322
        %v771 = vunpack.c.l.b16 %v323
        %v772 = vunpack.c.h.b16 %v323
        %v773 = vunpack.c.l.b16 %v324
        %v774 = vunpack.c.h.b16 %v324
        %v775 = vunpack.c.l.b16 %v325
        %v776 = vunpack.c.h.b16 %v325
        %v777 = vunpack.c.l.b16 %v326
        %v778 = vunpack.c.h.b16 %v326
        %v779 = vunpack.c.l.b16 %v327
        %v780 = vunpack.c.h.b16 %v327
        %v781 = vunpack.c.l.b16 %v328
        %v782 = vunpack.c.h.b16 %v328
        %v783 = vunpack.c.l.b16 %v329
        %v784 = vunpack.c.h.b16 %v329
        %v785 = vunpack.c.l.b16 %v330
        %v786 = vunpack.c.h.b16 %v330
        %v787 = vpack.c.b16 %v765, %v763
        %v788 = vpack.c.b16 %v766, %v764
        %v789 = vpack.c.b16 %v769, %v767
        %v790 = vpack.c.b16 %v770, %v768
        %v791 = vpack.c.b16 %v773, %v771
        %v792 = vpack.c.b16 %v774, %v772
        %v793 = vpack.c.b16 %v777, %v775
        %v794 = vpack.c.b16 %v778, %v776
        %v795 = vpack.c.b16 %v781, %v779
        %v796 = vpack.c.b16 %v782, %v780
        %v797 = vpack.c.b16 %v785, %v783
        %v798 = vpack.c.b16 %v786, %v784
        %vm811 = vcmask 785408
        %v813 = vsel %vm811, %v744, 0
        %v816 = vsel %vm811, %v745, 0
        %v819 = vsel %vm811, %v746, 0
        %v822 = vsel %vm811, %v747, 0
        %v825 = vsel %vm811, %v748, 0
        %v828 = vsel %vm811, %v749, 0
        %v831 = vsel %vm811, %v750, 0
        %833 = vmatpush.bf16.msra.mxu0 0
        %834 = vmatpush.bf16.msra.mxu0 0
        %835 = vmatpush.bf16.msra.mxu0 %v797
        %836 = vmatpush.bf16.msra.mxu0 %v795
        %837 = vmatpush.bf16.msra.mxu0 %v793
        %838 = vmatpush.bf16.msra.mxu0 %v791
        %839 = vmatpush.bf16.msra.mxu0 %v789
        %840 = vmatpush.bf16.msra.mxu0 %v787
        %841 = vmatmul.bf16.gmra.mxu0 %v813
        %v842 = vpop.f32.mrf.mxu0
        %v843 = vadd.f32 %v599, %v842
        %v844 = vpop.f32.mrf.mxu0
        %v845 = vadd.f32 %v601, %v844
        %846 = vmatmul.bf16.gmra.mxu0 %v816
        %v847 = vpop.f32.mrf.mxu0
        %v848 = vadd.f32 %v604, %v847
        %v849 = vpop.f32.mrf.mxu0
        %v850 = vadd.f32 %v606, %v849
        %851 = vmatmul.bf16.gmra.mxu0 %v819
        %v852 = vpop.f32.mrf.mxu0
        %v853 = vadd.f32 %v609, %v852
        %v854 = vpop.f32.mrf.mxu0
        %v855 = vadd.f32 %v611, %v854
        %856 = vmatmul.bf16.gmra.mxu0 %v822
        %v857 = vpop.f32.mrf.mxu0
        %v858 = vadd.f32 %v614, %v857
        %v859 = vpop.f32.mrf.mxu0
        %v860 = vadd.f32 %v616, %v859
        %861 = vmatmul.bf16.gmra.mxu0 %v825
        %v862 = vpop.f32.mrf.mxu0
        %v863 = vadd.f32 %v619, %v862
        %v864 = vpop.f32.mrf.mxu0
        %v865 = vadd.f32 %v621, %v864
        %866 = vmatmul.bf16.gmra.mxu0 %v828
        %v867 = vpop.f32.mrf.mxu0
        %v868 = vadd.f32 %v624, %v867
        %v869 = vpop.f32.mrf.mxu0
        %v870 = vadd.f32 %v626, %v869
        %871 = vmatmul.bf16.gmra.mxu0 %v831
        %v872 = vpop.f32.mrf.mxu0
        %v873 = vadd.f32 %v629, %v872
        %v874 = vpop.f32.mrf.mxu0
        %875 = vdwg.mxu0
        %876 = vmatpush.bf16.msra.mxu0 0
        %877 = vmatpush.bf16.msra.mxu0 0
        %878 = vmatpush.bf16.msra.mxu0 %v798
        %879 = vmatpush.bf16.msra.mxu0 %v796
        %880 = vmatpush.bf16.msra.mxu0 %v794
        %881 = vmatpush.bf16.msra.mxu0 %v792
        %882 = vmatpush.bf16.msra.mxu0 %v790
        %883 = vmatpush.bf16.msra.mxu0 %v788
        %884 = vmatmul.bf16.gmra.mxu0 %v813
        %v885 = vpop.f32.mrf.mxu0
        %v886 = vadd.f32 %v685, %v885
        %v887 = vpop.f32.mrf.mxu0
        %v888 = vadd.f32 %v687, %v887
        %889 = vmatmul.bf16.gmra.mxu0 %v816
        %v890 = vpop.f32.mrf.mxu0
        %v891 = vadd.f32 %v690, %v890
        %v892 = vpop.f32.mrf.mxu0
        %v893 = vadd.f32 %v692, %v892
        %894 = vmatmul.bf16.gmra.mxu0 %v819
        %v895 = vpop.f32.mrf.mxu0
        %v896 = vadd.f32 %v695, %v895
        %v897 = vpop.f32.mrf.mxu0
        %v898 = vadd.f32 %v697, %v897
        %899 = vmatmul.bf16.gmra.mxu0 %v822
        %v900 = vpop.f32.mrf.mxu0
        %v901 = vadd.f32 %v700, %v900
        %v902 = vpop.f32.mrf.mxu0
        %v903 = vadd.f32 %v702, %v902
        %904 = vmatmul.bf16.gmra.mxu0 %v825
        %v905 = vpop.f32.mrf.mxu0
        %v906 = vadd.f32 %v705, %v905
        %v907 = vpop.f32.mrf.mxu0
        %v908 = vadd.f32 %v707, %v907
        %909 = vmatmul.bf16.gmra.mxu0 %v828
        %v910 = vpop.f32.mrf.mxu0
        %v911 = vadd.f32 %v710, %v910
        %v912 = vpop.f32.mrf.mxu0
        %v913 = vadd.f32 %v712, %v912
        %914 = vmatmul.bf16.gmra.mxu0 %v831
        %v915 = vpop.f32.mrf.mxu0
        %v916 = vadd.f32 %v715, %v915
        %v917 = vpop.f32.mrf.mxu0
        %918 = vdwg.mxu0
        %v919 = vld [vmem:[%s4] sm:$0x3]
        %v921 = vperm.slane %v919, 0
        %v922 = vperm.slane %v919, 1
        %v925 = vadd.f32 %v843, %v921
        %v926 = vadd.f32 %v886, %v922
        %v927 = vadd.f32 %v845, %v921
        %v928 = vadd.f32 %v888, %v922
        %v929 = vadd.f32 %v848, %v921
        %v930 = vadd.f32 %v891, %v922
        %v931 = vadd.f32 %v850, %v921
        %v932 = vadd.f32 %v893, %v922
        %v933 = vadd.f32 %v853, %v921
        %v934 = vadd.f32 %v896, %v922
        %v935 = vadd.f32 %v855, %v921
        %v936 = vadd.f32 %v898, %v922
        %v937 = vadd.f32 %v858, %v921
        %v938 = vadd.f32 %v901, %v922
        %v939 = vadd.f32 %v860, %v921
        %v940 = vadd.f32 %v903, %v922
        %v941 = vadd.f32 %v863, %v921
        %v942 = vadd.f32 %v906, %v922
        %v943 = vadd.f32 %v865, %v921
        %v944 = vadd.f32 %v908, %v922
        %v945 = vadd.f32 %v868, %v921
        %v946 = vadd.f32 %v911, %v922
        %v947 = vadd.f32 %v870, %v921
        %v948 = vadd.f32 %v913, %v922
        %v949 = vadd.f32 %v873, %v921
        %v950 = vadd.f32 %v916, %v922
        %v951 = vmul.f32 %v925, 0.2
        %v952 = vmul.f32 %v926, 0.2
        %v953 = vmul.f32 %v927, 0.2
        %v954 = vmul.f32 %v928, 0.2
        %v955 = vmul.f32 %v929, 0.2
        %v956 = vmul.f32 %v930, 0.2
        %v957 = vmul.f32 %v931, 0.2
        %v958 = vmul.f32 %v932, 0.2
        %v959 = vmul.f32 %v933, 0.2
        %v960 = vmul.f32 %v934, 0.2
        %v961 = vmul.f32 %v935, 0.2
        %v962 = vmul.f32 %v936, 0.2
        %v963 = vmul.f32 %v937, 0.2
        %v964 = vmul.f32 %v938, 0.2
        %v965 = vmul.f32 %v939, 0.2
        %v966 = vmul.f32 %v940, 0.2
        %v967 = vmul.f32 %v941, 0.2
        %v968 = vmul.f32 %v942, 0.2
        %v969 = vmul.f32 %v943, 0.2
        %v970 = vmul.f32 %v944, 0.2
        %v971 = vmul.f32 %v945, 0.2
        %v972 = vmul.f32 %v946, 0.2
        %v973 = vmul.f32 %v947, 0.2
        %v974 = vmul.f32 %v948, 0.2
        %v975 = vmul.f32 %v949, 0.2
        %v976 = vmul.f32 %v950, 0.2
        %v977 = vmax.f32 %v925, %v951
        %v978 = vmax.f32 %v926, %v952
        %v979 = vmax.f32 %v927, %v953
        %v980 = vmax.f32 %v928, %v954
        %v981 = vmax.f32 %v929, %v955
        %v982 = vmax.f32 %v930, %v956
        %v983 = vmax.f32 %v931, %v957
        %v984 = vmax.f32 %v932, %v958
        %v985 = vmax.f32 %v933, %v959
        %v986 = vmax.f32 %v934, %v960
        %v987 = vmax.f32 %v935, %v961
        %v988 = vmax.f32 %v936, %v962
        %v989 = vmax.f32 %v937, %v963
        %v990 = vmax.f32 %v938, %v964
        %v991 = vmax.f32 %v939, %v965
        %v992 = vmax.f32 %v940, %v966
        %v993 = vmax.f32 %v941, %v967
        %v994 = vmax.f32 %v942, %v968
        %v995 = vmax.f32 %v943, %v969
        %v996 = vmax.f32 %v944, %v970
        %v997 = vmax.f32 %v945, %v971
        %v998 = vmax.f32 %v946, %v972
        %v999 = vmax.f32 %v947, %v973
        %v1000 = vmax.f32 %v948, %v974
        %v1001 = vmax.f32 %v949, %v975
        %v1002 = vmax.f32 %v950, %v976
        %v1003 = vpack.c.bf16 %v979, %v977
        %v1004 = vpack.c.bf16 %v980, %v978
        %v1005 = vpack.c.bf16 %v983, %v981
        %v1006 = vpack.c.bf16 %v984, %v982
        %v1007 = vpack.c.bf16 %v987, %v985
        %v1008 = vpack.c.bf16 %v988, %v986
        %v1009 = vpack.c.bf16 %v991, %v989
        %v1010 = vpack.c.bf16 %v992, %v990
        %v1011 = vpack.c.bf16 %v995, %v993
        %v1012 = vpack.c.bf16 %v996, %v994
        %v1013 = vpack.c.bf16 %v999, %v997
        %v1014 = vpack.c.bf16 %v1000, %v998
        %v1015 = vpack.c.bf16 %v1001, %v1001
        %v1016 = vpack.c.bf16 %v1002, %v1002
        %v1017 = vld [vmem:[%s5] sm:$0xf]
        %v1018 = vld [vmem:[%s5 + $0x4] sm:$0xf]
        %v1019 = vld [vmem:[%s5 + $0x8] sm:$0xf]
        %v1020 = vld [vmem:[%s5 + $0xc] sm:$0xf]
        %v1021 = vld [vmem:[%s5 + $0x10] sm:$0xf]
        %v1022 = vld [vmem:[%s5 + $0x14] sm:$0xf]
        %v1023 = vld [vmem:[%s5 + $0x18] sm:$0xf]
        %v1024 = vld [vmem:[%s5 + $0x1c] sm:$0xf]
        %v1025 = vld [vmem:[%s5 + $0x20] sm:$0xf]
        %v1026 = vld [vmem:[%s5 + $0x24] sm:$0xf]
        %v1027 = vld [vmem:[%s5 + $0x28] sm:$0xf]
        %v1028 = vld [vmem:[%s5 + $0x2c] sm:$0xf]
        %v1029 = vld [vmem:[%s5 + $0x30] sm:$0xf]
        %v1030 = vld [vmem:[%s5 + $0x34] sm:$0xf]
        %v1031 = vld [vmem:[%s5 + $0x38] sm:$0xf]
        %v1032 = vld [vmem:[%s5 + $0x3c] sm:$0xf]
        %v1033 = vld [vmem:[%s5 + $0x40] sm:$0xf]
        %v1034 = vld [vmem:[%s5 + $0x44] sm:$0xf]
        %v1035 = vld [vmem:[%s5 + $0x48] sm:$0xf]
        %v1036 = vld [vmem:[%s5 + $0x4c] sm:$0xf]
        %v1037 = vld [vmem:[%s5 + $0x50] sm:$0xf]
        %v1038 = vld [vmem:[%s5 + $0x54] sm:$0xf]
        %v1039 = vld [vmem:[%s5 + $0x58] sm:$0xf]
        %v1040 = vld [vmem:[%s5 + $0x5c] sm:$0xf]
        %v1041 = vld [vmem:[%s5 + $0x60] sm:$0xf]
        %v1042 = vld [vmem:[%s5 + $0x64] sm:$0xf]
        %v1043 = vld [vmem:[%s5 + $0x68] sm:$0xf]
        %v1044 = vld [vmem:[%s5 + $0x6c] sm:$0xf]
        %v1045 = vld [vmem:[%s5 + $0x70] sm:$0xf]
        %v1046 = vld [vmem:[%s5 + $0x74] sm:$0xf]
        %v1047 = vld [vmem:[%s5 + $0x78] sm:$0xf]
        %v1048 = vld [vmem:[%s5 + $0x7c] sm:$0xf]
        %v1049 = vld [vmem:[%s6] sm:$0x1]
        %v1051 = vperm.slane %v1049, 0
        %v1085 = vunpack.c.l.b16 %v1017
        %v1086 = vunpack.c.l.b16 %v1018
        %v1087 = vunpack.c.l.b16 %v1019
        %v1088 = vunpack.c.l.b16 %v1020
        %v1089 = vunpack.c.l.b16 %v1021
        %v1090 = vunpack.c.l.b16 %v1022
        %v1091 = vunpack.c.l.b16 %v1023
        %v1092 = vunpack.c.l.b16 %v1024
        %v1093 = vunpack.c.l.b16 %v1025
        %v1094 = vunpack.c.l.b16 %v1026
        %v1095 = vunpack.c.l.b16 %v1027
        %v1096 = vunpack.c.l.b16 %v1028
        %v1097 = vunpack.c.l.b16 %v1029
        %v1098 = vunpack.c.l.b16 %v1030
        %v1099 = vunpack.c.l.b16 %v1031
        %v1100 = vunpack.c.l.b16 %v1032
        %v1101 = vunpack.c.l.b16 %v1033
        %v1102 = vunpack.c.l.b16 %v1034
        %v1103 = vunpack.c.l.b16 %v1035
        %v1104 = vunpack.c.l.b16 %v1036
        %v1105 = vunpack.c.l.b16 %v1037
        %v1106 = vunpack.c.l.b16 %v1038
        %v1107 = vunpack.c.l.b16 %v1039
        %v1108 = vunpack.c.l.b16 %v1040
        %v1109 = vunpack.c.l.b16 %v1041
        %v1110 = vunpack.c.l.b16 %v1042
        %v1111 = vunpack.c.l.b16 %v1043
        %v1112 = vunpack.c.l.b16 %v1044
        %v1113 = vunpack.c.l.b16 %v1045
        %v1114 = vunpack.c.l.b16 %v1046
        %v1115 = vunpack.c.l.b16 %v1047
        %v1116 = vunpack.c.l.b16 %v1048
        %v1117 = vpack.c.b16 %v1086, %v1085
        %v1118 = vpack.c.b16 %v1088, %v1087
        %v1119 = vpack.c.b16 %v1090, %v1089
        %v1120 = vpack.c.b16 %v1092, %v1091
        %v1121 = vpack.c.b16 %v1094, %v1093
        %v1122 = vpack.c.b16 %v1096, %v1095
        %v1123 = vpack.c.b16 %v1098, %v1097
        %v1124 = vpack.c.b16 %v1100, %v1099
        %v1125 = vpack.c.b16 %v1102, %v1101
        %v1126 = vpack.c.b16 %v1104, %v1103
        %v1127 = vpack.c.b16 %v1106, %v1105
        %v1128 = vpack.c.b16 %v1108, %v1107
        %v1129 = vpack.c.b16 %v1110, %v1109
        %v1130 = vpack.c.b16 %v1112, %v1111
        %v1131 = vpack.c.b16 %v1114, %v1113
        %v1132 = vpack.c.b16 %v1116, %v1115
        %1149 = vmatpush.bf16.msra.mxu0 %v1124
        %1150 = vmatpush.bf16.msra.mxu0 %v1123
        %1151 = vmatpush.bf16.msra.mxu0 %v1122
        %1152 = vmatpush.bf16.msra.mxu0 %v1121
        %1153 = vmatpush.bf16.msra.mxu0 %v1120
        %1154 = vmatpush.bf16.msra.mxu0 %v1119
        %1155 = vmatpush.bf16.msra.mxu0 %v1118
        %1156 = vmatpush.bf16.msra.mxu0 %v1117
        %1157 = vmatmul.bf16.gmra.mxu0 %v1003
        %v1158 = vpop.f32.mrf.mxu0
        %v1159 = vadd.f32 %v1051, %v1158
        %v1160 = vpop.f32.mrf.mxu0
        %v1161 = vadd.f32 %v1051, %v1160
        %1162 = vmatmul.bf16.gmra.mxu0 %v1005
        %v1163 = vpop.f32.mrf.mxu0
        %v1164 = vadd.f32 %v1051, %v1163
        %v1165 = vpop.f32.mrf.mxu0
        %v1166 = vadd.f32 %v1051, %v1165
        %1167 = vmatmul.bf16.gmra.mxu0 %v1007
        %v1168 = vpop.f32.mrf.mxu0
        %v1169 = vadd.f32 %v1051, %v1168
        %v1170 = vpop.f32.mrf.mxu0
        %v1171 = vadd.f32 %v1051, %v1170
        %1172 = vmatmul.bf16.gmra.mxu0 %v1009
        %v1173 = vpop.f32.mrf.mxu0
        %v1174 = vadd.f32 %v1051, %v1173
        %v1175 = vpop.f32.mrf.mxu0
        %v1176 = vadd.f32 %v1051, %v1175
        %1177 = vmatmul.bf16.gmra.mxu0 %v1011
        %v1178 = vpop.f32.mrf.mxu0
        %v1179 = vadd.f32 %v1051, %v1178
        %v1180 = vpop.f32.mrf.mxu0
        %v1181 = vadd.f32 %v1051, %v1180
        %1182 = vmatmul.bf16.gmra.mxu0 %v1013
        %v1183 = vpop.f32.mrf.mxu0
        %v1184 = vadd.f32 %v1051, %v1183
        %v1185 = vpop.f32.mrf.mxu0
        %v1186 = vadd.f32 %v1051, %v1185
        %1187 = vmatmul.bf16.gmra.mxu0 %v1015
        %v1188 = vpop.f32.mrf.mxu0
        %v1189 = vadd.f32 %v1051, %v1188
        %v1190 = vpop.f32.mrf.mxu0
        %1191 = vdwg.mxu0
        %1192 = vmatpush.bf16.msra.mxu0 %v1132
        %1193 = vmatpush.bf16.msra.mxu0 %v1131
        %1194 = vmatpush.bf16.msra.mxu0 %v1130
        %1195 = vmatpush.bf16.msra.mxu0 %v1129
        %1196 = vmatpush.bf16.msra.mxu0 %v1128
        %1197 = vmatpush.bf16.msra.mxu0 %v1127
        %1198 = vmatpush.bf16.msra.mxu0 %v1126
        %1199 = vmatpush.bf16.msra.mxu0 %v1125
        %1200 = vmatmul.bf16.gmra.mxu0 %v1004
        %v1201 = vpop.f32.mrf.mxu0
        %v1202 = vadd.f32 %v1159, %v1201
        %v1203 = vpop.f32.mrf.mxu0
        %v1204 = vadd.f32 %v1161, %v1203
        %1205 = vmatmul.bf16.gmra.mxu0 %v1006
        %v1206 = vpop.f32.mrf.mxu0
        %v1207 = vadd.f32 %v1164, %v1206
        %v1208 = vpop.f32.mrf.mxu0
        %v1209 = vadd.f32 %v1166, %v1208
        %1210 = vmatmul.bf16.gmra.mxu0 %v1008
        %v1211 = vpop.f32.mrf.mxu0
        %v1212 = vadd.f32 %v1169, %v1211
        %v1213 = vpop.f32.mrf.mxu0
        %v1214 = vadd.f32 %v1171, %v1213
        %1215 = vmatmul.bf16.gmra.mxu0 %v1010
        %v1216 = vpop.f32.mrf.mxu0
        %v1217 = vadd.f32 %v1174, %v1216
        %v1218 = vpop.f32.mrf.mxu0
        %v1219 = vadd.f32 %v1176, %v1218
        %1220 = vmatmul.bf16.gmra.mxu0 %v1012
        %v1221 = vpop.f32.mrf.mxu0
        %v1222 = vadd.f32 %v1179, %v1221
        %v1223 = vpop.f32.mrf.mxu0
        %v1224 = vadd.f32 %v1181, %v1223
        %1225 = vmatmul.bf16.gmra.mxu0 %v1014
        %v1226 = vpop.f32.mrf.mxu0
        %v1227 = vadd.f32 %v1184, %v1226
        %v1228 = vpop.f32.mrf.mxu0
        %v1229 = vadd.f32 %v1186, %v1228
        %1230 = vmatmul.bf16.gmra.mxu0 %v1016
        %v1231 = vpop.f32.mrf.mxu0
        %v1232 = vadd.f32 %v1189, %v1231
        %v1233 = vpop.f32.mrf.mxu0
        %1234 = vdwg.mxu0
        %v1235 = vpack.c.bf16 %v1202, %v1202
        %v1236 = vpack.c.bf16 %v1204, %v1204
        %v1237 = vpack.c.bf16 %v1207, %v1207
        %v1238 = vpack.c.bf16 %v1209, %v1209
        %v1239 = vpack.c.bf16 %v1212, %v1212
        %v1240 = vpack.c.bf16 %v1214, %v1214
        %v1241 = vpack.c.bf16 %v1217, %v1217
        %v1242 = vpack.c.bf16 %v1219, %v1219
        %v1243 = vpack.c.bf16 %v1222, %v1222
        %v1244 = vpack.c.bf16 %v1224, %v1224
        %v1245 = vpack.c.bf16 %v1227, %v1227
        %v1246 = vpack.c.bf16 %v1229, %v1229
        %v1247 = vpack.c.bf16 %v1232, %v1232
        %1248 = vst [vmem:[%s290] sm:$0xf] %v1235
        %1249 = vst [vmem:[%s290 + $0x4] sm:$0xf] %v1236
        %1250 = vst [vmem:[%s290 + $0x8] sm:$0xf] %v1237
        %1251 = vst [vmem:[%s290 + $0xc] sm:$0xf] %v1238
        %1252 = vst [vmem:[%s290 + $0x10] sm:$0xf] %v1239
        %1253 = vst [vmem:[%s290 + $0x14] sm:$0xf] %v1240
        %1254 = vst [vmem:[%s290 + $0x18] sm:$0xf] %v1241
        %1255 = vst [vmem:[%s290 + $0x1c] sm:$0xf] %v1242
        %1256 = vst [vmem:[%s290 + $0x20] sm:$0xf] %v1243
        %1257 = vst [vmem:[%s290 + $0x24] sm:$0xf] %v1244
        %1258 = vst [vmem:[%s290 + $0x28] sm:$0xf] %v1245
        %1259 = vst [vmem:[%s290 + $0x2c] sm:$0xf] %v1246
        %1260 = vst [vmem:[%s290 + $0x30] sm:$0xf] %v1247
        %s1261 = sand.u32 %s186, 1
        %s1262 = scalar_lea.sflag [#allocation3], %s1261
        %s1263 = sand.u32 %s186, 1
        %s1264 = smul.addr %s1263, 52
        %s1265 = scalar_lea.vmem [#allocation2], %s1264
        // Predicated region
        $region49: #{tpu_custom_call.1} parent=47 // pred_check
          %p1266 = pneg %p196
        $region50: #{tpu_custom_call.1} parent=47 // pred_check_branch
          %1268 = sbr.rel (%p1266) target = $region52
        $region51: #{tpu_custom_call.1} parent=47 // pred_region
          %s1269 = smul.u32 13, %s21
          %1271 = vsyncadd %s1262, 0
          %s1272 = smul.addr %s1269, 4
          %s1273 = scalar_lea.hbm %s7, %s1272
          %s1274 = sshll.u32 %s1265, 4
          %s1275 = int_to_ptr.vmem [resolvable:$true] %s1274
          %s1276 = sshll.u32 %s1273, 4
          %s1277 = int_to_ptr.hbm [resolvable:$true] %s1276
          %1282 = dma.vmem_to_hbm [thread:$0]  %s1275, 832, %s1277, %s1262, 64, 64, 4
        $region52: #{tpu_custom_call.1} parent=47 // pred_fallthru
          _
      $region48: #{tpu_custom_call.1} parent=5 // pred_fallthru
        _
      %p1283 = scmp.le.s32.totalorder 2, %s16
      // Predicated region
      $region53: #{tpu_custom_call.1} parent=5 // pred_check
        %p1284 = pneg %p1283
      $region54: #{tpu_custom_call.1} parent=5 // pred_check_branch
        %1286 = sbr.rel (%p1284) target = $region56
      $region55: #{tpu_custom_call.1} parent=5 // pred_region
        %s1287 = ssub.s32 %s16, 2
        // Predicated region
        $region57: #{tpu_custom_call.1} parent=55 // pred_check
          %p1288 = pneg %p202
        $region58: #{tpu_custom_call.1} parent=55 // pred_check_branch
          %1290 = sbr.rel (%p1288) target = $region60
        $region59: #{tpu_custom_call.1} parent=55 // pred_region
          %s1291 = sand.u32 %s187, 1
          %s1292 = scalar_lea.sflag [#allocation3], %s1291
          %s1293 = sand.u32 %s187, 1
          %s1294 = smul.addr %s1293, 52
          %s1295 = scalar_lea.vmem [#allocation2], %s1294
          %1297 = dma.done %s1292, 832
        $region60: #{tpu_custom_call.1} parent=55 // pred_fallthru
          _
      $region56: #{tpu_custom_call.1} parent=5 // pred_fallthru
        _
    $region6: #{tpu_custom_call.1} parent=1 // loop_footer
      %s20 = sadd.s32 1, %s16
    $region7: #{tpu_custom_call.1} parent=1 // loop_footer_branch
      %15 = sbr.rel target = $region3
    $region8: #{tpu_custom_call.1} parent=1 // loop_exit
      _
    %1298 = vsyncpa [#allocation3], 1
    %s1299 = scalar_lea.sflag [#allocation3], 1
    %1300 = vsyncpa %s1299, 1

// kernel: tpu_custom_call.1
$region0: #{tpu_custom_call.1}
  #allocation0 [shape = 'u32[]', space=smem, size = 0x4, offset = 0x4, fixed_abs, tag = 'smem constant byte address 0x4 - core index']
  #allocation1 [shape = 'u32[72,128]{1,0:T(1,128)}', space=vmem, size = 0x9000, scoped, tag = 'internal scratch']
  %s0 = inlined_call_operand.vmem [shape: bf16[208,96], index: 0, kind: input, shape index: {}]
  %s1 = inlined_call_operand.vmem [shape: bf16[208,160], index: 1, kind: input, shape index: {}]
  %s2 = inlined_call_operand.vmem [shape: bf16[96,256], index: 2, kind: input, shape index: {}]
  %s3 = inlined_call_operand.vmem [shape: bf16[160,256], index: 3, kind: input, shape index: {}]
  %s4 = inlined_call_operand.vmem [shape: f32[1,256], index: 4, kind: input, shape index: {}]
  %s5 = inlined_call_operand.vmem [shape: bf16[256,128], index: 5, kind: input, shape index: {}]
  %s6 = inlined_call_operand.vmem [shape: f32[1,128], index: 6, kind: input, shape index: {}]
  %s7 = inlined_call_operand.hbm [shape: bf16[208,128], index: 7, kind: output, shape index: {}]
  %s8 = sld [smem:[#allocation0]]
  $region61: #{tpu_custom_call.1} parent=0
    _
  %s10 = ssub.s32 1, %s8
  %s11 = scalar_select 0, %s10, %s8
  $region1: #{tpu_custom_call.1} parent=0
    #allocation2 [shape = 'u8[53248]{0}', space=vmem, size = 0xd000, scoped, tag = 'output window, operand 0']
    #allocation3 [shape = 's32[2]{0}', space=sflag, size = 0x8, scoped, tag = 'scoped memory for tpu_custom_call.1']
    %12 = vsyncpa [#allocation3], 0
    %s13 = scalar_lea.sflag [#allocation3], 1
    %14 = vsyncpa %s13, 0
    loop: start=0, step=1, limit=4
    $region2: #{tpu_custom_call.1} parent=1 // loop_pre_header
      _
    $region3: #{tpu_custom_call.1} parent=1 // loop_header
      %s16 = sphi 0, %s20
      %p17 = scmp.ge.s32.totalorder %s16, 4
      %s26 = sphi 0, %s28
      %s29 = sphi 0, %s26
      %s30 = sphi 0, %s29
      %s46 = sphi 0, %s30
      %s52 = sphi 0, %s54
      %s55 = sphi 0, %s52
      %s56 = sphi 0, %s55
      %s72 = sphi 0, %s56
      %s76 = sphi 0, %s76
      %s78 = sphi 0, %s76
      %s79 = sphi 0, %s78
      %s93 = sphi 0, %s79
      %s97 = sphi 0, %s97
      %s99 = sphi 0, %s97
      %s100 = sphi 0, %s99
      %s114 = sphi 0, %s100
      %s118 = sphi 0, %s118
      %s120 = sphi 0, %s118
      %s121 = sphi 0, %s120
      %s135 = sphi 0, %s121
      %s139 = sphi 0, %s139
      %s141 = sphi 0, %s139
      %s142 = sphi 0, %s141
      %s156 = sphi 0, %s142
      %s160 = sphi 0, %s160
      %s162 = sphi 0, %s160
      %s163 = sphi 0, %s162
      %s177 = sphi 0, %s163
      %s183 = sphi 0, %s185
      %s186 = sphi 0, %s183
      %s187 = sphi 0, %s186
      %s203 = sphi 0, %s187
    $region4: #{tpu_custom_call.1} parent=1 // loop_header_branch
      %19 = sbr.rel (%p17) target = $region8
    $region5: #{tpu_custom_call.1} parent=1 // loop_body
      %s21 = ssub.s32 %s16, 1
      %s22 = ssub.s32 %s16, 2
      %s23 = sadd.s32 %s16, 1
      %s24 = ssub.s32 %s16, %s23
      %p25 = scmp.eq.s32.totalorder %s24, 0
      %s27 = sadd.s32 %s26, 1
      %s28 = scalar_select %p25, %s26, %s27
      %p31 = pneg %p25
      %p32 = scmp.eq.s32.totalorder %s16, 1
      %p33 = por %p31, %p32
      %p34 = scmp.ne.s32.totalorder %s26, %s29
      %p35 = scmp.eq.s32.totalorder %s16, 0
      %p36 = por %p34, %p35
      %p37 = scmp.ne.s32.totalorder %s26, %s29
      %p38 = scmp.eq.s32.totalorder %s21, 1
      %p39 = por %p37, %p38
      %p40 = scmp.ne.s32.totalorder %s29, %s30
      %p41 = scmp.eq.s32.totalorder %s21, 0
      %p42 = por %p40, %p41
      %p43 = scmp.ne.s32.totalorder %s29, %s30
      %p44 = scmp.eq.s32.totalorder %s22, 1
      %p45 = por %p43, %p44
      %p47 = scmp.ne.s32.totalorder %s30, %s46
      %p48 = scmp.eq.s32.totalorder %s22, 0
      %p49 = por %p47, %p48
      %s50 = ssub.s32 %s16, %s23
      %p51 = scmp.eq.s32.totalorder %s50, 0
      %s53 = sadd.s32 %s52, 1
      %s54 = scalar_select %p51, %s52, %s53
      %p57 = pneg %p51
      %p58 = scmp.eq.s32.totalorder %s16, 1
      %p59 = por %p57, %p58
      %p60 = scmp.ne.s32.totalorder %s52, %s55
      %p61 = scmp.eq.s32.totalorder %s16, 0
      %p62 = por %p60, %p61
      %p63 = scmp.ne.s32.totalorder %s52, %s55
      %p64 = scmp.eq.s32.totalorder %s21, 1
      %p65 = por %p63, %p64
      %p66 = scmp.ne.s32.totalorder %s55, %s56
      %p67 = scmp.eq.s32.totalorder %s21, 0
      %p68 = por %p66, %p67
      %p69 = scmp.ne.s32.totalorder %s55, %s56
      %p70 = scmp.eq.s32.totalorder %s22, 1
      %p71 = por %p69, %p70
      %p73 = scmp.ne.s32.totalorder %s56, %s72
      %p74 = scmp.eq.s32.totalorder %s22, 0
      %p75 = por %p73, %p74
      %s77 = sadd.s32 %s76, 1
      %p80 = scmp.eq.s32.totalorder %s16, 1
      %p81 = scmp.ne.s32.totalorder %s76, %s78
      %p82 = scmp.eq.s32.totalorder %s16, 0
      %p83 = por %p81, %p82
      %p84 = scmp.ne.s32.totalorder %s76, %s78
      %p85 = scmp.eq.s32.totalorder %s21, 1
      %p86 = por %p84, %p85
      %p87 = scmp.ne.s32.totalorder %s78, %s79
      %p88 = scmp.eq.s32.totalorder %s21, 0
      %p89 = por %p87, %p88
      %p90 = scmp.ne.s32.totalorder %s78, %s79
      %p91 = scmp.eq.s32.totalorder %s22, 1
      %p92 = por %p90, %p91
      %p94 = scmp.ne.s32.totalorder %s79, %s93
      %p95 = scmp.eq.s32.totalorder %s22, 0
      %p96 = por %p94, %p95
      %s98 = sadd.s32 %s97, 1
      %p101 = scmp.eq.s32.totalorder %s16, 1
      %p102 = scmp.ne.s32.totalorder %s97, %s99
      %p103 = scmp.eq.s32.totalorder %s16, 0
      %p104 = por %p102, %p103
      %p105 = scmp.ne.s32.totalorder %s97, %s99
      %p106 = scmp.eq.s32.totalorder %s21, 1
      %p107 = por %p105, %p106
      %p108 = scmp.ne.s32.totalorder %s99, %s100
      %p109 = scmp.eq.s32.totalorder %s21, 0
      %p110 = por %p108, %p109
      %p111 = scmp.ne.s32.totalorder %s99, %s100
      %p112 = scmp.eq.s32.totalorder %s22, 1
      %p113 = por %p111, %p112
      %p115 = scmp.ne.s32.totalorder %s100, %s114
      %p116 = scmp.eq.s32.totalorder %s22, 0
      %p117 = por %p115, %p116
      %s119 = sadd.s32 %s118, 1
      %p122 = scmp.eq.s32.totalorder %s16, 1
      %p123 = scmp.ne.s32.totalorder %s118, %s120
      %p124 = scmp.eq.s32.totalorder %s16, 0
      %p125 = por %p123, %p124
      %p126 = scmp.ne.s32.totalorder %s118, %s120
      %p127 = scmp.eq.s32.totalorder %s21, 1
      %p128 = por %p126, %p127
      %p129 = scmp.ne.s32.totalorder %s120, %s121
      %p130 = scmp.eq.s32.totalorder %s21, 0
      %p131 = por %p129, %p130
      %p132 = scmp.ne.s32.totalorder %s120, %s121
      %p133 = scmp.eq.s32.totalorder %s22, 1
      %p134 = por %p132, %p133
      %p136 = scmp.ne.s32.totalorder %s121, %s135
      %p137 = scmp.eq.s32.totalorder %s22, 0
      %p138 = por %p136, %p137
      %s140 = sadd.s32 %s139, 1
      %p143 = scmp.eq.s32.totalorder %s16, 1
      %p144 = scmp.ne.s32.totalorder %s139, %s141
      %p145 = scmp.eq.s32.totalorder %s16, 0
      %p146 = por %p144, %p145
      %p147 = scmp.ne.s32.totalorder %s139, %s141
      %p148 = scmp.eq.s32.totalorder %s21, 1
      %p149 = por %p147, %p148
      %p150 = scmp.ne.s32.totalorder %s141, %s142
      %p151 = scmp.eq.s32.totalorder %s21, 0
      %p152 = por %p150, %p151
      %p153 = scmp.ne.s32.totalorder %s141, %s142
      %p154 = scmp.eq.s32.totalorder %s22, 1
      %p155 = por %p153, %p154
      %p157 = scmp.ne.s32.totalorder %s142, %s156
      %p158 = scmp.eq.s32.totalorder %s22, 0
      %p159 = por %p157, %p158
      %s161 = sadd.s32 %s160, 1
      %p164 = scmp.eq.s32.totalorder %s16, 1
      %p165 = scmp.ne.s32.totalorder %s160, %s162
      %p166 = scmp.eq.s32.totalorder %s16, 0
      %p167 = por %p165, %p166
      %p168 = scmp.ne.s32.totalorder %s160, %s162
      %p169 = scmp.eq.s32.totalorder %s21, 1
      %p170 = por %p168, %p169
      %p171 = scmp.ne.s32.totalorder %s162, %s163
      %p172 = scmp.eq.s32.totalorder %s21, 0
      %p173 = por %p171, %p172
      %p174 = scmp.ne.s32.totalorder %s162, %s163
      %p175 = scmp.eq.s32.totalorder %s22, 1
      %p176 = por %p174, %p175
      %p178 = scmp.ne.s32.totalorder %s163, %s177
      %p179 = scmp.eq.s32.totalorder %s22, 0
      %p180 = por %p178, %p179
      %s181 = ssub.s32 %s16, %s23
      %p182 = scmp.eq.s32.totalorder %s181, 0
      %s184 = sadd.s32 %s183, 1
      %s185 = scalar_select %p182, %s183, %s184
      %p188 = pneg %p182
      %p189 = scmp.eq.s32.totalorder %s16, 1
      %p190 = por %p188, %p189
      %p191 = scmp.ne.s32.totalorder %s183, %s186
      %p192 = scmp.eq.s32.totalorder %s16, 0
      %p193 = por %p191, %p192
      %p194 = scmp.ne.s32.totalorder %s183, %s186
      %p195 = scmp.eq.s32.totalorder %s21, 1
      %p196 = por %p194, %p195
      %p197 = scmp.ne.s32.totalorder %s186, %s187
      %p198 = scmp.eq.s32.totalorder %s21, 0
      %p199 = por %p197, %p198
      %p200 = scmp.ne.s32.totalorder %s186, %s187
      %p201 = scmp.eq.s32.totalorder %s22, 1
      %p202 = por %p200, %p201
      %p204 = scmp.ne.s32.totalorder %s187, %s203
      %p205 = scmp.eq.s32.totalorder %s22, 0
      %p206 = por %p204, %p205
      %p207 = scmp.le.s32.totalorder 1, %s16
      %p208 = scmp.lt.s32.totalorder %s16, 3
      %p209 = pnand %p207, %p208
      %p210 = pneg %p209
      // Predicated region
      $region9: #{tpu_custom_call.1} parent=5 // pred_check
        _
      $region10: #{tpu_custom_call.1} parent=5 // pred_check_branch
        %212 = sbr.rel (%p209) target = $region12
      $region11: #{tpu_custom_call.1} parent=5 // pred_region
        %s213 = ssub.s32 %s16, 1
        // Predicated region
        $region13: #{tpu_custom_call.1} parent=11 // pred_check
          %p214 = pneg %p89
        $region14: #{tpu_custom_call.1} parent=11 // pred_check_branch
          %216 = sbr.rel (%p214) target = $region16
        $region15: #{tpu_custom_call.1} parent=11 // pred_region
          _
        $region16: #{tpu_custom_call.1} parent=11 // pred_fallthru
          _
        // Predicated region
        $region17: #{tpu_custom_call.1} parent=11 // pred_check
          %p217 = pneg %p110
        $region18: #{tpu_custom_call.1} parent=11 // pred_check_branch
          %219 = sbr.rel (%p217) target = $region20
        $region19: #{tpu_custom_call.1} parent=11 // pred_region
          _
        $region20: #{tpu_custom_call.1} parent=11 // pred_fallthru
          _
        // Predicated region
        $region21: #{tpu_custom_call.1} parent=11 // pred_check
          %p220 = pneg %p131
        $region22: #{tpu_custom_call.1} parent=11 // pred_check_branch
          %222 = sbr.rel (%p220) target = $region24
        $region23: #{tpu_custom_call.1} parent=11 // pred_region
          _
        $region24: #{tpu_custom_call.1} parent=11 // pred_fallthru
          _
        // Predicated region
        $region25: #{tpu_custom_call.1} parent=11 // pred_check
          %p223 = pneg %p152
        $region26: #{tpu_custom_call.1} parent=11 // pred_check_branch
          %225 = sbr.rel (%p223) target = $region28
        $region27: #{tpu_custom_call.1} parent=11 // pred_region
          _
        $region28: #{tpu_custom_call.1} parent=11 // pred_fallthru
          _
        // Predicated region
        $region29: #{tpu_custom_call.1} parent=11 // pred_check
          %p226 = pneg %p173
        $region30: #{tpu_custom_call.1} parent=11 // pred_check_branch
          %228 = sbr.rel (%p226) target = $region32
        $region31: #{tpu_custom_call.1} parent=11 // pred_region
          _
        $region32: #{tpu_custom_call.1} parent=11 // pred_fallthru
          _
      $region12: #{tpu_custom_call.1} parent=5 // pred_fallthru
        _
      %p229 = scmp.lt.s32.totalorder %s16, 2
      // Predicated region
      $region33: #{tpu_custom_call.1} parent=5 // pred_check
        %p230 = pneg %p229
      $region34: #{tpu_custom_call.1} parent=5 // pred_check_branch
        %232 = sbr.rel (%p230) target = $region36
      $region35: #{tpu_custom_call.1} parent=5 // pred_region
        // Predicated region
        $region37: #{tpu_custom_call.1} parent=35 // pred_check
          %p233 = pneg %p36
        $region38: #{tpu_custom_call.1} parent=35 // pred_check_branch
          %235 = sbr.rel (%p233) target = $region40
        $region39: #{tpu_custom_call.1} parent=35 // pred_region
          %s236 = smul.u32 13, %s16
          %p237 = scmp.lt.s32.totalorder %s236, 25
          %s238 = scalar_select %p237, %s236, 25
          %s239 = smul.addr %s238, 4
          %s240 = scalar_lea.vmem %s0, %s239
          %s241 = smul.u32 13, %s16
        $region40: #{tpu_custom_call.1} parent=35 // pred_fallthru
          _
        // Predicated region
        $region41: #{tpu_custom_call.1} parent=35 // pred_check
          %p242 = pneg %p62
        $region42: #{tpu_custom_call.1} parent=35 // pred_check_branch
          %244 = sbr.rel (%p242) target = $region44
        $region43: #{tpu_custom_call.1} parent=35 // pred_region
          %s245 = smul.u32 13, %s16
          %p246 = scmp.lt.s32.totalorder %s245, 25
          %s247 = scalar_select %p246, %s245, 25
          %s248 = smul.addr %s247, 2
          %s249 = smul.addr %s248, 4
          %s250 = scalar_lea.vmem %s1, %s249
          %s251 = smul.u32 13, %s16
        $region44: #{tpu_custom_call.1} parent=35 // pred_fallthru
          _
      $region36: #{tpu_custom_call.1} parent=5 // pred_fallthru
        _
      %p252 = scmp.le.s32.totalorder 1, %s16
      %p253 = scmp.lt.s32.totalorder %s16, 3
      %p254 = pnand %p252, %p253
      %p255 = pneg %p254
      // Predicated region
      $region45: #{tpu_custom_call.1} parent=5 // pred_check
        _
      $region46: #{tpu_custom_call.1} parent=5 // pred_check_branch
        %257 = sbr.rel (%p254) target = $region48
      $region47: #{tpu_custom_call.1} parent=5 // pred_region
        %s258 = ssub.s32 %s16, 1
        %s259 = smul.u32 13, %s21
        %p260 = scmp.lt.s32.totalorder %s259, 25
        %s261 = scalar_select %p260, %s259, 25
        %s262 = smul.addr %s261, 4
        %s263 = scalar_lea.vmem %s0, %s262
        %p264 = pneg %p42
        %p265 = pneg %p39
        %s266 = smul.u32 13, %s21
        %p267 = scmp.lt.s32.totalorder %s266, 25
        %s268 = scalar_select %p267, %s266, 25
        %s269 = smul.addr %s268, 2
        %s270 = smul.addr %s269, 4
        %s271 = scalar_lea.vmem %s1, %s270
        %p272 = pneg %p68
        %p273 = pneg %p65
        %p274 = pneg %p89
        %p275 = pneg %p86
        %p276 = pneg %p110
        %p277 = pneg %p107
        %p278 = pneg %p131
        %p279 = pneg %p128
        %p280 = pneg %p152
        %p281 = pneg %p149
        %p282 = pneg %p173
        %p283 = pneg %p170
        %p284 = pneg %p199
        %p285 = pneg %p196
        %s286 = sand.u32 %s186, 1
        %s287 = scalar_lea.sflag [#allocation3], %s286
        %s288 = sand.u32 %s186, 1
        %s289 = smul.addr %s288, 52
        %s290 = scalar_lea.vmem [#allocation2], %s289
        %s291 = smul.u32 13, %s21
        %p292 = scmp.lt.s32.totalorder %s291, 25
        %s293 = scalar_select %p292, %s291, 25
        %s294 = smul.addr %s293, 4
        %s295 = scalar_lea.vmem %s0, %s294
        %s296 = smul.u32 13, %s21
        %s297 = smul.u32 13, %s21
        %p298 = scmp.lt.s32.totalorder %s297, 25
        %s299 = scalar_select %p298, %s297, 25
        %s300 = smul.addr %s299, 2
        %s301 = smul.addr %s300, 4
        %s302 = scalar_lea.vmem %s1, %s301
        %s303 = smul.u32 13, %s21
        %s304 = smul.u32 13, %s21
        %v306 = vld [vmem:[%s295] sm:$0xf]
        %v307 = vld [vmem:[%s295 + $0x4] sm:$0xf]
        %v308 = vld [vmem:[%s295 + $0x8] sm:$0xf]
        %v309 = vld [vmem:[%s295 + $0xc] sm:$0xf]
        %v310 = vld [vmem:[%s295 + $0x10] sm:$0xf]
        %v311 = vld [vmem:[%s295 + $0x14] sm:$0xf]
        %v312 = vld [vmem:[%s295 + $0x18] sm:$0xf]
        %v313 = vld [vmem:[%s295 + $0x1c] sm:$0xf]
        %v314 = vld [vmem:[%s295 + $0x20] sm:$0xf]
        %v315 = vld [vmem:[%s295 + $0x24] sm:$0xf]
        %v316 = vld [vmem:[%s295 + $0x28] sm:$0xf]
        %v317 = vld [vmem:[%s295 + $0x2c] sm:$0xf]
        %v318 = vld [vmem:[%s295 + $0x30] sm:$0xf]
        %v319 = vld [vmem:[%s2] sm:$0xff]
        %v320 = vld [vmem:[%s2 + $0x8] sm:$0xff]
        %v321 = vld [vmem:[%s2 + $0x10] sm:$0xff]
        %v322 = vld [vmem:[%s2 + $0x18] sm:$0xff]
        %v323 = vld [vmem:[%s2 + $0x20] sm:$0xff]
        %v324 = vld [vmem:[%s2 + $0x28] sm:$0xff]
        %v325 = vld [vmem:[%s2 + $0x30] sm:$0xff]
        %v326 = vld [vmem:[%s2 + $0x38] sm:$0xff]
        %v327 = vld [vmem:[%s2 + $0x40] sm:$0xff]
        %v328 = vld [vmem:[%s2 + $0x48] sm:$0xff]
        %v329 = vld [vmem:[%s2 + $0x50] sm:$0xff]
        %v330 = vld [vmem:[%s2 + $0x58] sm:$0xff]
        %v331 = vld [vmem:[%s302] sm:$0xff]
        %v332 = vld [vmem:[%s302 + $0x8] sm:$0xff]
        %v333 = vld [vmem:[%s302 + $0x10] sm:$0xff]
        %v334 = vld [vmem:[%s302 + $0x18] sm:$0xff]
        %v335 = vld [vmem:[%s302 + $0x20] sm:$0xff]
        %v336 = vld [vmem:[%s302 + $0x28] sm:$0xff]
        %v337 = vld [vmem:[%s302 + $0x30] sm:$0xff]
        %v338 = vld [vmem:[%s302 + $0x38] sm:$0xff]
        %v339 = vld [vmem:[%s302 + $0x40] sm:$0xff]
        %v340 = vld [vmem:[%s302 + $0x48] sm:$0xff]
        %v341 = vld [vmem:[%s302 + $0x50] sm:$0xff]
        %v342 = vld [vmem:[%s302 + $0x58] sm:$0xff]
        %v343 = vld [vmem:[%s302 + $0x60] sm:$0xff]
        %v344 = vld [vmem:[%s3] sm:$0xff]
        %v345 = vld [vmem:[%s3 + $0x8] sm:$0xff]
        %v346 = vld [vmem:[%s3 + $0x10] sm:$0xff]
        %v347 = vld [vmem:[%s3 + $0x18] sm:$0xff]
        %v348 = vld [vmem:[%s3 + $0x20] sm:$0xff]
        %v349 = vld [vmem:[%s3 + $0x28] sm:$0xff]
        %v350 = vld [vmem:[%s3 + $0x30] sm:$0xff]
        %v351 = vld [vmem:[%s3 + $0x38] sm:$0xff]
        %v352 = vld [vmem:[%s3 + $0x40] sm:$0xff]
        %v353 = vld [vmem:[%s3 + $0x48] sm:$0xff]
        %v354 = vld [vmem:[%s3 + $0x50] sm:$0xff]
        %v355 = vld [vmem:[%s3 + $0x58] sm:$0xff]
        %v356 = vld [vmem:[%s3 + $0x60] sm:$0xff]
        %v357 = vld [vmem:[%s3 + $0x68] sm:$0xff]
        %v358 = vld [vmem:[%s3 + $0x70] sm:$0xff]
        %v359 = vld [vmem:[%s3 + $0x78] sm:$0xff]
        %v360 = vld [vmem:[%s3 + $0x80] sm:$0xff]
        %v361 = vld [vmem:[%s3 + $0x88] sm:$0xff]
        %v362 = vld [vmem:[%s3 + $0x90] sm:$0xff]
        %v363 = vld [vmem:[%s3 + $0x98] sm:$0xff]
        %v377 = vunpack.c.l.b16 %v331
        %v378 = vunpack.c.h.b16 %v331
        %v379 = vunpack.c.l.b16 %v332
        %v380 = vunpack.c.h.b16 %v332
        %v381 = vunpack.c.l.b16 %v333
        %v382 = vunpack.c.h.b16 %v333
        %v383 = vunpack.c.l.b16 %v334
        %v384 = vunpack.c.h.b16 %v334
        %v385 = vunpack.c.l.b16 %v335
        %v386 = vunpack.c.h.b16 %v335
        %v387 = vunpack.c.l.b16 %v336
        %v388 = vunpack.c.h.b16 %v336
        %v389 = vunpack.c.l.b16 %v337
        %v390 = vunpack.c.h.b16 %v337
        %v391 = vunpack.c.l.b16 %v338
        %v392 = vunpack.c.h.b16 %v338
        %v393 = vunpack.c.l.b16 %v339
        %v394 = vunpack.c.h.b16 %v339
        %v395 = vunpack.c.l.b16 %v340
        %v396 = vunpack.c.h.b16 %v340
        %v397 = vunpack.c.l.b16 %v341
        %v398 = vunpack.c.h.b16 %v341
        %v399 = vunpack.c.l.b16 %v342
        %v400 = vunpack.c.h.b16 %v342
        %v401 = vunpack.c.l.b16 %v343
        %v402 = vunpack.c.h.b16 %v343
        %v403 = vpack.c.b16 %v379, %v377
        %v404 = vpack.c.b16 %v380, %v378
        %v405 = vpack.c.b16 %v383, %v381
        %v406 = vpack.c.b16 %v384, %v382
        %v407 = vpack.c.b16 %v387, %v385
        %v408 = vpack.c.b16 %v388, %v386
        %v409 = vpack.c.b16 %v391, %v389
        %v410 = vpack.c.b16 %v392, %v390
        %v411 = vpack.c.b16 %v395, %v393
        %v412 = vpack.c.b16 %v396, %v394
        %v413 = vpack.c.b16 %v399, %v397
        %v414 = vpack.c.b16 %v400, %v398
        %v415 = vpack.c.b16 %v401, %v401
        %v416 = vpack.c.b16 %v402, %v402
        %v444 = vunpack.c.l.b16 %v344
        %v445 = vunpack.c.h.b16 %v344
        %v446 = vunpack.c.l.b16 %v345
        %v447 = vunpack.c.h.b16 %v345
        %v448 = vunpack.c.l.b16 %v346
        %v449 = vunpack.c.h.b16 %v346
        %v450 = vunpack.c.l.b16 %v347
        %v451 = vunpack.c.h.b16 %v347
        %v452 = vunpack.c.l.b16 %v348
        %v453 = vunpack.c.h.b16 %v348
        %v454 = vunpack.c.l.b16 %v349
        %v455 = vunpack.c.h.b16 %v349
        %v456 = vunpack.c.l.b16 %v350
        %v457 = vunpack.c.h.b16 %v350
        %v458 = vunpack.c.l.b16 %v351
        %v459 = vunpack.c.h.b16 %v351
        %v460 = vunpack.c.l.b16 %v352
        %v461 = vunpack.c.h.b16 %v352
        %v462 = vunpack.c.l.b16 %v353
        %v463 = vunpack.c.h.b16 %v353
        %v464 = vunpack.c.l.b16 %v354
        %v465 = vunpack.c.h.b16 %v354
        %v466 = vunpack.c.l.b16 %v355
        %v467 = vunpack.c.h.b16 %v355
        %v468 = vunpack.c.l.b16 %v356
        %v469 = vunpack.c.h.b16 %v356
        %v470 = vunpack.c.l.b16 %v357
        %v471 = vunpack.c.h.b16 %v357
        %v472 = vunpack.c.l.b16 %v358
        %v473 = vunpack.c.h.b16 %v358
        %v474 = vunpack.c.l.b16 %v359
        %v475 = vunpack.c.h.b16 %v359
        %v476 = vunpack.c.l.b16 %v360
        %v477 = vunpack.c.h.b16 %v360
        %v478 = vunpack.c.l.b16 %v361
        %v479 = vunpack.c.h.b16 %v361
        %v480 = vunpack.c.l.b16 %v362
        %v481 = vunpack.c.h.b16 %v362
        %v482 = vunpack.c.l.b16 %v363
        %v483 = vunpack.c.h.b16 %v363
        %v484 = vpack.c.b16 %v446, %v444
        %v485 = vpack.c.b16 %v447, %v445
        %v486 = vpack.c.b16 %v450, %v448
        %v487 = vpack.c.b16 %v451, %v449
        %v488 = vpack.c.b16 %v454, %v452
        %v489 = vpack.c.b16 %v455, %v453
        %v490 = vpack.c.b16 %v458, %v456
        %v491 = vpack.c.b16 %v459, %v457
        %v492 = vpack.c.b16 %v462, %v460
        %v493 = vpack.c.b16 %v463, %v461
        %v494 = vpack.c.b16 %v466, %v464
        %v495 = vpack.c.b16 %v467, %v465
        %v496 = vpack.c.b16 %v470, %v468
        %v497 = vpack.c.b16 %v471, %v469
        %v498 = vpack.c.b16 %v474, %v472
        %v499 = vpack.c.b16 %v475, %v473
        %v500 = vpack.c.b16 %v478, %v476
        %v501 = vpack.c.b16 %v479, %v477
        %v502 = vpack.c.b16 %v482, %v480
        %v503 = vpack.c.b16 %v483, %v481
        %vm524 = vcmask 261120
        %v526 = vsel %vm524, %v404, 0
        %v529 = vsel %vm524, %v406, 0
        %v532 = vsel %vm524, %v408, 0
        %v535 = vsel %vm524, %v410, 0
        %v538 = vsel %vm524, %v412, 0
        %v541 = vsel %vm524, %v414, 0
        %v544 = vsel %vm524, %v416, 0
        %546 = vmatpush.bf16.msra.mxu0 %v498
        %547 = vmatpush.bf16.msra.mxu0 %v496
        %548 = vmatpush.bf16.msra.mxu0 %v494
        %549 = vmatpush.bf16.msra.mxu0 %v492
        %550 = vmatpush.bf16.msra.mxu0 %v490
        %551 = vmatpush.bf16.msra.mxu0 %v488
        %552 = vmatpush.bf16.msra.mxu0 %v486
        %553 = vmatpush.bf16.msra.mxu0 %v484
        %554 = vmatmul.bf16.gmra.mxu0 %v403
        %v555 = vpop.f32.mrf.mxu0
        %v556 = vadd.f32 0.0, %v555
        %v557 = vpop.f32.mrf.mxu0
        %v558 = vadd.f32 0.0, %v557
        %559 = vmatmul.bf16.gmra.mxu0 %v405
        %v560 = vpop.f32.mrf.mxu0
        %v561 = vadd.f32 0.0, %v560
        %v562 = vpop.f32.mrf.mxu0
        %v563 = vadd.f32 0.0, %v562
        %564 = vmatmul.bf16.gmra.mxu0 %v407
        %v565 = vpop.f32.mrf.mxu0
        %v566 = vadd.f32 0.0, %v565
        %v567 = vpop.f32.mrf.mxu0
        %v568 = vadd.f32 0.0, %v567
        %569 = vmatmul.bf16.gmra.mxu0 %v409
        %v570 = vpop.f32.mrf.mxu0
        %v571 = vadd.f32 0.0, %v570
        %v572 = vpop.f32.mrf.mxu0
        %v573 = vadd.f32 0.0, %v572
        %574 = vmatmul.bf16.gmra.mxu0 %v411
        %v575 = vpop.f32.mrf.mxu0
        %v576 = vadd.f32 0.0, %v575
        %v577 = vpop.f32.mrf.mxu0
        %v578 = vadd.f32 0.0, %v577
        %579 = vmatmul.bf16.gmra.mxu0 %v413
        %v580 = vpop.f32.mrf.mxu0
        %v581 = vadd.f32 0.0, %v580
        %v582 = vpop.f32.mrf.mxu0
        %v583 = vadd.f32 0.0, %v582
        %584 = vmatmul.bf16.gmra.mxu0 %v415
        %v585 = vpop.f32.mrf.mxu0
        %v586 = vadd.f32 0.0, %v585
        %v587 = vpop.f32.mrf.mxu0
        %588 = vdwg.mxu0
        %589 = vmatpush.bf16.msra.mxu0 0
        %590 = vmatpush.bf16.msra.mxu0 0
        %591 = vmatpush.bf16.msra.mxu0 0
        %592 = vmatpush.bf16.msra.mxu0 0
        %593 = vmatpush.bf16.msra.mxu0 0
        %594 = vmatpush.bf16.msra.mxu0 0
        %595 = vmatpush.bf16.msra.mxu0 %v502
        %596 = vmatpush.bf16.msra.mxu0 %v500
        %597 = vmatmul.bf16.gmra.mxu0 %v526
        %v598 = vpop.f32.mrf.mxu0
        %v599 = vadd.f32 %v556, %v598
        %v600 = vpop.f32.mrf.mxu0
        %v601 = vadd.f32 %v558, %v600
        %602 = vmatmul.bf16.gmra.mxu0 %v529
        %v603 = vpop.f32.mrf.mxu0
        %v604 = vadd.f32 %v561, %v603
        %v605 = vpop.f32.mrf.mxu0
        %v606 = vadd.f32 %v563, %v605
        %607 = vmatmul.bf16.gmra.mxu0 %v532
        %v608 = vpop.f32.mrf.mxu0
        %v609 = vadd.f32 %v566, %v608
        %v610 = vpop.f32.mrf.mxu0
        %v611 = vadd.f32 %v568, %v610
        %612 = vmatmul.bf16.gmra.mxu0 %v535
        %v613 = vpop.f32.mrf.mxu0
        %v614 = vadd.f32 %v571, %v613
        %v615 = vpop.f32.mrf.mxu0
        %v616 = vadd.f32 %v573, %v615
        %617 = vmatmul.bf16.gmra.mxu0 %v538
        %v618 = vpop.f32.mrf.mxu0
        %v619 = vadd.f32 %v576, %v618
        %v620 = vpop.f32.mrf.mxu0
        %v621 = vadd.f32 %v578, %v620
        %622 = vmatmul.bf16.gmra.mxu0 %v541
        %v623 = vpop.f32.mrf.mxu0
        %v624 = vadd.f32 %v581, %v623
        %v625 = vpop.f32.mrf.mxu0
        %v626 = vadd.f32 %v583, %v625
        %627 = vmatmul.bf16.gmra.mxu0 %v544
        %v628 = vpop.f32.mrf.mxu0
        %v629 = vadd.f32 %v586, %v628
        %v630 = vpop.f32.mrf.mxu0
        %631 = vdwg.mxu0
        %632 = vmatpush.bf16.msra.mxu0 %v499
        %633 = vmatpush.bf16.msra.mxu0 %v497
        %634 = vmatpush.bf16.msra.mxu0 %v495
        %635 = vmatpush.bf16.msra.mxu0 %v493
        %636 = vmatpush.bf16.msra.mxu0 %v491
        %637 = vmatpush.bf16.msra.mxu0 %v489
        %638 = vmatpush.bf16.msra.mxu0 %v487
        %639 = vmatpush.bf16.msra.mxu0 %v485
        %640 = vmatmul.bf16.gmra.mxu0 %v403
        %v641 = vpop.f32.mrf.mxu0
        %v642 = vadd.f32 0.0, %v641
        %v643 = vpop.f32.mrf.mxu0
        %v644 = vadd.f32 0.0, %v643
        %645 = vmatmul.bf16.gmra.mxu0 %v405
        %v646 = vpop.f32.mrf.mxu0
        %v647 = vadd.f32 0.0, %v646
        %v648 = vpop.f32.mrf.mxu0
        %v649 = vadd.f32 0.0, %v648
        %650 = vmatmul.bf16.gmra.mxu0 %v407
        %v651 = vpop.f32.mrf.mxu0
        %v652 = vadd.f32 0.0, %v651
        %v653 = vpop.f32.mrf.mxu0
        %v654 = vadd.f32 0.0, %v653
        %655 = vmatmul.bf16.gmra.mxu0 %v409
        %v656 = vpop.f32.mrf.mxu0
        %v657 = vadd.f32 0.0, %v656
        %v658 = vpop.f32.mrf.mxu0
        %v659 = vadd.f32 0.0, %v658
        %660 = vmatmul.bf16.gmra.mxu0 %v411
        %v661 = vpop.f32.mrf.mxu0
        %v662 = vadd.f32 0.0, %v661
        %v663 = vpop.f32.mrf.mxu0
        %v664 = vadd.f32 0.0, %v663
        %665 = vmatmul.bf16.gmra.mxu0 %v413
        %v666 = vpop.f32.mrf.mxu0
        %v667 = vadd.f32 0.0, %v666
        %v668 = vpop.f32.mrf.mxu0
        %v669 = vadd.f32 0.0, %v668
        %670 = vmatmul.bf16.gmra.mxu0 %v415
        %v671 = vpop.f32.mrf.mxu0
        %v672 = vadd.f32 0.0, %v671
        %v673 = vpop.f32.mrf.mxu0
        %674 = vdwg.mxu0
        %675 = vmatpush.bf16.msra.mxu0 0
        %676 = vmatpush.bf16.msra.mxu0 0
        %677 = vmatpush.bf16.msra.mxu0 0
        %678 = vmatpush.bf16.msra.mxu0 0
        %679 = vmatpush.bf16.msra.mxu0 0
        %680 = vmatpush.bf16.msra.mxu0 0
        %681 = vmatpush.bf16.msra.mxu0 %v503
        %682 = vmatpush.bf16.msra.mxu0 %v501
        %683 = vmatmul.bf16.gmra.mxu0 %v526
        %v684 = vpop.f32.mrf.mxu0
        %v685 = vadd.f32 %v642, %v684
        %v686 = vpop.f32.mrf.mxu0
        %v687 = vadd.f32 %v644, %v686
        %688 = vmatmul.bf16.gmra.mxu0 %v529
        %v689 = vpop.f32.mrf.mxu0
        %v690 = vadd.f32 %v647, %v689
        %v691 = vpop.f32.mrf.mxu0
        %v692 = vadd.f32 %v649, %v691
        %693 = vmatmul.bf16.gmra.mxu0 %v532
        %v694 = vpop.f32.mrf.mxu0
        %v695 = vadd.f32 %v652, %v694
        %v696 = vpop.f32.mrf.mxu0
        %v697 = vadd.f32 %v654, %v696
        %698 = vmatmul.bf16.gmra.mxu0 %v535
        %v699 = vpop.f32.mrf.mxu0
        %v700 = vadd.f32 %v657, %v699
        %v701 = vpop.f32.mrf.mxu0
        %v702 = vadd.f32 %v659, %v701
        %703 = vmatmul.bf16.gmra.mxu0 %v538
        %v704 = vpop.f32.mrf.mxu0
        %v705 = vadd.f32 %v662, %v704
        %v706 = vpop.f32.mrf.mxu0
        %v707 = vadd.f32 %v664, %v706
        %708 = vmatmul.bf16.gmra.mxu0 %v541
        %v709 = vpop.f32.mrf.mxu0
        %v710 = vadd.f32 %v667, %v709
        %v711 = vpop.f32.mrf.mxu0
        %v712 = vadd.f32 %v669, %v711
        %713 = vmatmul.bf16.gmra.mxu0 %v544
        %v714 = vpop.f32.mrf.mxu0
        %v715 = vadd.f32 %v672, %v714
        %v716 = vpop.f32.mrf.mxu0
        %717 = vdwg.mxu0
        %v731 = vunpack.c.l.b16 %v306
        %v732 = vunpack.c.l.b16 %v307
        %v733 = vunpack.c.l.b16 %v308
        %v734 = vunpack.c.l.b16 %v309
        %v735 = vunpack.c.l.b16 %v310
        %v736 = vunpack.c.l.b16 %v311
        %v737 = vunpack.c.l.b16 %v312
        %v738 = vunpack.c.l.b16 %v313
        %v739 = vunpack.c.l.b16 %v314
        %v740 = vunpack.c.l.b16 %v315
        %v741 = vunpack.c.l.b16 %v316
        %v742 = vunpack.c.l.b16 %v317
        %v743 = vunpack.c.l.b16 %v318
        %v744 = vpack.c.b16 %v732, %v731
        %v745 = vpack.c.b16 %v734, %v733
        %v746 = vpack.c.b16 %v736, %v735
        %v747 = vpack.c.b16 %v738, %v737
        %v748 = vpack.c.b16 %v740, %v739
        %v749 = vpack.c.b16 %v742, %v741
        %v750 = vpack.c.b16 %v743, %v743
        %v763 = vunpack.c.l.b16 %v319
        %v764 = vunpack.c.h.b16 %v319
        %v765 = vunpack.c.l.b16 %v320
        %v766 = vunpack.c.h.b16 %v320
        %v767 = vunpack.c.l.b16 %v321
        %v768 = vunpack.c.h.b16 %v321
        %v769 = vunpack.c.l.b16 %v322
        %v770 = vunpack.c.h.b16 %v322
        %v771 = vunpack.c.l.b16 %v323
        %v772 = vunpack.c.h.b16 %v323
        %v773 = vunpack.c.l.b16 %v324
        %v774 = vunpack.c.h.b16 %v324
        %v775 = vunpack.c.l.b16 %v325
        %v776 = vunpack.c.h.b16 %v325
        %v777 = vunpack.c.l.b16 %v326
        %v778 = vunpack.c.h.b16 %v326
        %v779 = vunpack.c.l.b16 %v327
        %v780 = vunpack.c.h.b16 %v327
        %v781 = vunpack.c.l.b16 %v328
        %v782 = vunpack.c.h.b16 %v328
        %v783 = vunpack.c.l.b16 %v329
        %v784 = vunpack.c.h.b16 %v329
        %v785 = vunpack.c.l.b16 %v330
        %v786 = vunpack.c.h.b16 %v330
        %v787 = vpack.c.b16 %v765, %v763
        %v788 = vpack.c.b16 %v766, %v764
        %v789 = vpack.c.b16 %v769, %v767
        %v790 = vpack.c.b16 %v770, %v768
        %v791 = vpack.c.b16 %v773, %v771
        %v792 = vpack.c.b16 %v774, %v772
        %v793 = vpack.c.b16 %v777, %v775
        %v794 = vpack.c.b16 %v778, %v776
        %v795 = vpack.c.b16 %v781, %v779
        %v796 = vpack.c.b16 %v782, %v780
        %v797 = vpack.c.b16 %v785, %v783
        %v798 = vpack.c.b16 %v786, %v784
        %vm811 = vcmask 785408
        %v813 = vsel %vm811, %v744, 0
        %v816 = vsel %vm811, %v745, 0
        %v819 = vsel %vm811, %v746, 0
        %v822 = vsel %vm811, %v747, 0
        %v825 = vsel %vm811, %v748, 0
        %v828 = vsel %vm811, %v749, 0
        %v831 = vsel %vm811, %v750, 0
        %833 = vmatpush.bf16.msra.mxu0 0
        %834 = vmatpush.bf16.msra.mxu0 0
        %835 = vmatpush.bf16.msra.mxu0 %v797
        %836 = vmatpush.bf16.msra.mxu0 %v795
        %837 = vmatpush.bf16.msra.mxu0 %v793
        %838 = vmatpush.bf16.msra.mxu0 %v791
        %839 = vmatpush.bf16.msra.mxu0 %v789
        %840 = vmatpush.bf16.msra.mxu0 %v787
        %841 = vmatmul.bf16.gmra.mxu0 %v813
        %v842 = vpop.f32.mrf.mxu0
        %v843 = vadd.f32 %v599, %v842
        %v844 = vpop.f32.mrf.mxu0
        %v845 = vadd.f32 %v601, %v844
        %846 = vmatmul.bf16.gmra.mxu0 %v816
        %v847 = vpop.f32.mrf.mxu0
        %v848 = vadd.f32 %v604, %v847
        %v849 = vpop.f32.mrf.mxu0
        %v850 = vadd.f32 %v606, %v849
        %851 = vmatmul.bf16.gmra.mxu0 %v819
        %v852 = vpop.f32.mrf.mxu0
        %v853 = vadd.f32 %v609, %v852
        %v854 = vpop.f32.mrf.mxu0
        %v855 = vadd.f32 %v611, %v854
        %856 = vmatmul.bf16.gmra.mxu0 %v822
        %v857 = vpop.f32.mrf.mxu0
        %v858 = vadd.f32 %v614, %v857
        %v859 = vpop.f32.mrf.mxu0
        %v860 = vadd.f32 %v616, %v859
        %861 = vmatmul.bf16.gmra.mxu0 %v825
        %v862 = vpop.f32.mrf.mxu0
        %v863 = vadd.f32 %v619, %v862
        %v864 = vpop.f32.mrf.mxu0
        %v865 = vadd.f32 %v621, %v864
        %866 = vmatmul.bf16.gmra.mxu0 %v828
        %v867 = vpop.f32.mrf.mxu0
        %v868 = vadd.f32 %v624, %v867
        %v869 = vpop.f32.mrf.mxu0
        %v870 = vadd.f32 %v626, %v869
        %871 = vmatmul.bf16.gmra.mxu0 %v831
        %v872 = vpop.f32.mrf.mxu0
        %v873 = vadd.f32 %v629, %v872
        %v874 = vpop.f32.mrf.mxu0
        %875 = vdwg.mxu0
        %876 = vmatpush.bf16.msra.mxu0 0
        %877 = vmatpush.bf16.msra.mxu0 0
        %878 = vmatpush.bf16.msra.mxu0 %v798
        %879 = vmatpush.bf16.msra.mxu0 %v796
        %880 = vmatpush.bf16.msra.mxu0 %v794
        %881 = vmatpush.bf16.msra.mxu0 %v792
        %882 = vmatpush.bf16.msra.mxu0 %v790
        %883 = vmatpush.bf16.msra.mxu0 %v788
        %884 = vmatmul.bf16.gmra.mxu0 %v813
        %v885 = vpop.f32.mrf.mxu0
        %v886 = vadd.f32 %v685, %v885
        %v887 = vpop.f32.mrf.mxu0
        %v888 = vadd.f32 %v687, %v887
        %889 = vmatmul.bf16.gmra.mxu0 %v816
        %v890 = vpop.f32.mrf.mxu0
        %v891 = vadd.f32 %v690, %v890
        %v892 = vpop.f32.mrf.mxu0
        %v893 = vadd.f32 %v692, %v892
        %894 = vmatmul.bf16.gmra.mxu0 %v819
        %v895 = vpop.f32.mrf.mxu0
        %v896 = vadd.f32 %v695, %v895
        %v897 = vpop.f32.mrf.mxu0
        %v898 = vadd.f32 %v697, %v897
        %899 = vmatmul.bf16.gmra.mxu0 %v822
        %v900 = vpop.f32.mrf.mxu0
        %v901 = vadd.f32 %v700, %v900
        %v902 = vpop.f32.mrf.mxu0
        %v903 = vadd.f32 %v702, %v902
        %904 = vmatmul.bf16.gmra.mxu0 %v825
        %v905 = vpop.f32.mrf.mxu0
        %v906 = vadd.f32 %v705, %v905
        %v907 = vpop.f32.mrf.mxu0
        %v908 = vadd.f32 %v707, %v907
        %909 = vmatmul.bf16.gmra.mxu0 %v828
        %v910 = vpop.f32.mrf.mxu0
        %v911 = vadd.f32 %v710, %v910
        %v912 = vpop.f32.mrf.mxu0
        %v913 = vadd.f32 %v712, %v912
        %914 = vmatmul.bf16.gmra.mxu0 %v831
        %v915 = vpop.f32.mrf.mxu0
        %v916 = vadd.f32 %v715, %v915
        %v917 = vpop.f32.mrf.mxu0
        %918 = vdwg.mxu0
        %v919 = vld [vmem:[%s4] sm:$0x3]
        %v921 = vperm.slane %v919, 0
        %v922 = vperm.slane %v919, 1
        %v925 = vadd.f32 %v843, %v921
        %v926 = vadd.f32 %v886, %v922
        %v927 = vadd.f32 %v845, %v921
        %v928 = vadd.f32 %v888, %v922
        %v929 = vadd.f32 %v848, %v921
        %v930 = vadd.f32 %v891, %v922
        %v931 = vadd.f32 %v850, %v921
        %v932 = vadd.f32 %v893, %v922
        %v933 = vadd.f32 %v853, %v921
        %v934 = vadd.f32 %v896, %v922
        %v935 = vadd.f32 %v855, %v921
        %v936 = vadd.f32 %v898, %v922
        %v937 = vadd.f32 %v858, %v921
        %v938 = vadd.f32 %v901, %v922
        %v939 = vadd.f32 %v860, %v921
        %v940 = vadd.f32 %v903, %v922
        %v941 = vadd.f32 %v863, %v921
        %v942 = vadd.f32 %v906, %v922
        %v943 = vadd.f32 %v865, %v921
        %v944 = vadd.f32 %v908, %v922
        %v945 = vadd.f32 %v868, %v921
        %v946 = vadd.f32 %v911, %v922
        %v947 = vadd.f32 %v870, %v921
        %v948 = vadd.f32 %v913, %v922
        %v949 = vadd.f32 %v873, %v921
        %v950 = vadd.f32 %v916, %v922
        %v951 = vmul.f32 %v925, 0.2
        %v952 = vmul.f32 %v926, 0.2
        %v953 = vmul.f32 %v927, 0.2
        %v954 = vmul.f32 %v928, 0.2
        %v955 = vmul.f32 %v929, 0.2
        %v956 = vmul.f32 %v930, 0.2
        %v957 = vmul.f32 %v931, 0.2
        %v958 = vmul.f32 %v932, 0.2
        %v959 = vmul.f32 %v933, 0.2
        %v960 = vmul.f32 %v934, 0.2
        %v961 = vmul.f32 %v935, 0.2
        %v962 = vmul.f32 %v936, 0.2
        %v963 = vmul.f32 %v937, 0.2
        %v964 = vmul.f32 %v938, 0.2
        %v965 = vmul.f32 %v939, 0.2
        %v966 = vmul.f32 %v940, 0.2
        %v967 = vmul.f32 %v941, 0.2
        %v968 = vmul.f32 %v942, 0.2
        %v969 = vmul.f32 %v943, 0.2
        %v970 = vmul.f32 %v944, 0.2
        %v971 = vmul.f32 %v945, 0.2
        %v972 = vmul.f32 %v946, 0.2
        %v973 = vmul.f32 %v947, 0.2
        %v974 = vmul.f32 %v948, 0.2
        %v975 = vmul.f32 %v949, 0.2
        %v976 = vmul.f32 %v950, 0.2
        %v977 = vmax.f32 %v925, %v951
        %v978 = vmax.f32 %v926, %v952
        %v979 = vmax.f32 %v927, %v953
        %v980 = vmax.f32 %v928, %v954
        %v981 = vmax.f32 %v929, %v955
        %v982 = vmax.f32 %v930, %v956
        %v983 = vmax.f32 %v931, %v957
        %v984 = vmax.f32 %v932, %v958
        %v985 = vmax.f32 %v933, %v959
        %v986 = vmax.f32 %v934, %v960
        %v987 = vmax.f32 %v935, %v961
        %v988 = vmax.f32 %v936, %v962
        %v989 = vmax.f32 %v937, %v963
        %v990 = vmax.f32 %v938, %v964
        %v991 = vmax.f32 %v939, %v965
        %v992 = vmax.f32 %v940, %v966
        %v993 = vmax.f32 %v941, %v967
        %v994 = vmax.f32 %v942, %v968
        %v995 = vmax.f32 %v943, %v969
        %v996 = vmax.f32 %v944, %v970
        %v997 = vmax.f32 %v945, %v971
        %v998 = vmax.f32 %v946, %v972
        %v999 = vmax.f32 %v947, %v973
        %v1000 = vmax.f32 %v948, %v974
        %v1001 = vmax.f32 %v949, %v975
        %v1002 = vmax.f32 %v950, %v976
        %v1003 = vpack.c.bf16 %v979, %v977
        %v1004 = vpack.c.bf16 %v980, %v978
        %v1005 = vpack.c.bf16 %v983, %v981
        %v1006 = vpack.c.bf16 %v984, %v982
        %v1007 = vpack.c.bf16 %v987, %v985
        %v1008 = vpack.c.bf16 %v988, %v986
        %v1009 = vpack.c.bf16 %v991, %v989
        %v1010 = vpack.c.bf16 %v992, %v990
        %v1011 = vpack.c.bf16 %v995, %v993
        %v1012 = vpack.c.bf16 %v996, %v994
        %v1013 = vpack.c.bf16 %v999, %v997
        %v1014 = vpack.c.bf16 %v1000, %v998
        %v1015 = vpack.c.bf16 %v1001, %v1001
        %v1016 = vpack.c.bf16 %v1002, %v1002
        %v1017 = vld [vmem:[%s5] sm:$0xf]
        %v1018 = vld [vmem:[%s5 + $0x4] sm:$0xf]
        %v1019 = vld [vmem:[%s5 + $0x8] sm:$0xf]
        %v1020 = vld [vmem:[%s5 + $0xc] sm:$0xf]
        %v1021 = vld [vmem:[%s5 + $0x10] sm:$0xf]
        %v1022 = vld [vmem:[%s5 + $0x14] sm:$0xf]
        %v1023 = vld [vmem:[%s5 + $0x18] sm:$0xf]
        %v1024 = vld [vmem:[%s5 + $0x1c] sm:$0xf]
        %v1025 = vld [vmem:[%s5 + $0x20] sm:$0xf]
        %v1026 = vld [vmem:[%s5 + $0x24] sm:$0xf]
        %v1027 = vld [vmem:[%s5 + $0x28] sm:$0xf]
        %v1028 = vld [vmem:[%s5 + $0x2c] sm:$0xf]
        %v1029 = vld [vmem:[%s5 + $0x30] sm:$0xf]
        %v1030 = vld [vmem:[%s5 + $0x34] sm:$0xf]
        %v1031 = vld [vmem:[%s5 + $0x38] sm:$0xf]
        %v1032 = vld [vmem:[%s5 + $0x3c] sm:$0xf]
        %v1033 = vld [vmem:[%s5 + $0x40] sm:$0xf]
        %v1034 = vld [vmem:[%s5 + $0x44] sm:$0xf]
        %v1035 = vld [vmem:[%s5 + $0x48] sm:$0xf]
        %v1036 = vld [vmem:[%s5 + $0x4c] sm:$0xf]
        %v1037 = vld [vmem:[%s5 + $0x50] sm:$0xf]
        %v1038 = vld [vmem:[%s5 + $0x54] sm:$0xf]
        %v1039 = vld [vmem:[%s5 + $0x58] sm:$0xf]
        %v1040 = vld [vmem:[%s5 + $0x5c] sm:$0xf]
        %v1041 = vld [vmem:[%s5 + $0x60] sm:$0xf]
        %v1042 = vld [vmem:[%s5 + $0x64] sm:$0xf]
        %v1043 = vld [vmem:[%s5 + $0x68] sm:$0xf]
        %v1044 = vld [vmem:[%s5 + $0x6c] sm:$0xf]
        %v1045 = vld [vmem:[%s5 + $0x70] sm:$0xf]
        %v1046 = vld [vmem:[%s5 + $0x74] sm:$0xf]
        %v1047 = vld [vmem:[%s5 + $0x78] sm:$0xf]
        %v1048 = vld [vmem:[%s5 + $0x7c] sm:$0xf]
        %v1049 = vld [vmem:[%s6] sm:$0x1]
        %v1051 = vperm.slane %v1049, 0
        %v1085 = vunpack.c.l.b16 %v1017
        %v1086 = vunpack.c.l.b16 %v1018
        %v1087 = vunpack.c.l.b16 %v1019
        %v1088 = vunpack.c.l.b16 %v1020
        %v1089 = vunpack.c.l.b16 %v1021
        %v1090 = vunpack.c.l.b16 %v1022
        %v1091 = vunpack.c.l.b16 %v1023
        %v1092 = vunpack.c.l.b16 %v1024
        %v1093 = vunpack.c.l.b16 %v1025
        %v1094 = vunpack.c.l.b16 %v1026
        %v1095 = vunpack.c.l.b16 %v1027
        %v1096 = vunpack.c.l.b16 %v1028
        %v1097 = vunpack.c.l.b16 %v1029
        %v1098 = vunpack.c.l.b16 %v1030
        %v1099 = vunpack.c.l.b16 %v1031
        %v1100 = vunpack.c.l.b16 %v1032
        %v1101 = vunpack.c.l.b16 %v1033
        %v1102 = vunpack.c.l.b16 %v1034
        %v1103 = vunpack.c.l.b16 %v1035
        %v1104 = vunpack.c.l.b16 %v1036
        %v1105 = vunpack.c.l.b16 %v1037
        %v1106 = vunpack.c.l.b16 %v1038
        %v1107 = vunpack.c.l.b16 %v1039
        %v1108 = vunpack.c.l.b16 %v1040
        %v1109 = vunpack.c.l.b16 %v1041
        %v1110 = vunpack.c.l.b16 %v1042
        %v1111 = vunpack.c.l.b16 %v1043
        %v1112 = vunpack.c.l.b16 %v1044
        %v1113 = vunpack.c.l.b16 %v1045
        %v1114 = vunpack.c.l.b16 %v1046
        %v1115 = vunpack.c.l.b16 %v1047
        %v1116 = vunpack.c.l.b16 %v1048
        %v1117 = vpack.c.b16 %v1086, %v1085
        %v1118 = vpack.c.b16 %v1088, %v1087
        %v1119 = vpack.c.b16 %v1090, %v1089
        %v1120 = vpack.c.b16 %v1092, %v1091
        %v1121 = vpack.c.b16 %v1094, %v1093
        %v1122 = vpack.c.b16 %v1096, %v1095
        %v1123 = vpack.c.b16 %v1098, %v1097
        %v1124 = vpack.c.b16 %v1100, %v1099
        %v1125 = vpack.c.b16 %v1102, %v1101
        %v1126 = vpack.c.b16 %v1104, %v1103
        %v1127 = vpack.c.b16 %v1106, %v1105
        %v1128 = vpack.c.b16 %v1108, %v1107
        %v1129 = vpack.c.b16 %v1110, %v1109
        %v1130 = vpack.c.b16 %v1112, %v1111
        %v1131 = vpack.c.b16 %v1114, %v1113
        %v1132 = vpack.c.b16 %v1116, %v1115
        %1149 = vmatpush.bf16.msra.mxu0 %v1124
        %1150 = vmatpush.bf16.msra.mxu0 %v1123
        %1151 = vmatpush.bf16.msra.mxu0 %v1122
        %1152 = vmatpush.bf16.msra.mxu0 %v1121
        %1153 = vmatpush.bf16.msra.mxu0 %v1120
        %1154 = vmatpush.bf16.msra.mxu0 %v1119
        %1155 = vmatpush.bf16.msra.mxu0 %v1118
        %1156 = vmatpush.bf16.msra.mxu0 %v1117
        %1157 = vmatmul.bf16.gmra.mxu0 %v1003
        %v1158 = vpop.f32.mrf.mxu0
        %v1159 = vadd.f32 %v1051, %v1158
        %v1160 = vpop.f32.mrf.mxu0
        %v1161 = vadd.f32 %v1051, %v1160
        %1162 = vmatmul.bf16.gmra.mxu0 %v1005
        %v1163 = vpop.f32.mrf.mxu0
        %v1164 = vadd.f32 %v1051, %v1163
        %v1165 = vpop.f32.mrf.mxu0
        %v1166 = vadd.f32 %v1051, %v1165
        %1167 = vmatmul.bf16.gmra.mxu0 %v1007
        %v1168 = vpop.f32.mrf.mxu0
        %v1169 = vadd.f32 %v1051, %v1168
        %v1170 = vpop.f32.mrf.mxu0
        %v1171 = vadd.f32 %v1051, %v1170
        %1172 = vmatmul.bf16.gmra.mxu0 %v1009
        %v1173 = vpop.f32.mrf.mxu0
        %v1174 = vadd.f32 %v1051, %v1173
        %v1175 = vpop.f32.mrf.mxu0
        %v1176 = vadd.f32 %v1051, %v1175
        %1177 = vmatmul.bf16.gmra.mxu0 %v1011
        %v1178 = vpop.f32.mrf.mxu0
        %v1179 = vadd.f32 %v1051, %v1178
        %v1180 = vpop.f32.mrf.mxu0
        %v1181 = vadd.f32 %v1051, %v1180
        %1182 = vmatmul.bf16.gmra.mxu0 %v1013
        %v1183 = vpop.f32.mrf.mxu0
        %v1184 = vadd.f32 %v1051, %v1183
        %v1185 = vpop.f32.mrf.mxu0
        %v1186 = vadd.f32 %v1051, %v1185
        %1187 = vmatmul.bf16.gmra.mxu0 %v1015
        %v1188 = vpop.f32.mrf.mxu0
        %v1189 = vadd.f32 %v1051, %v1188
        %v1190 = vpop.f32.mrf.mxu0
        %1191 = vdwg.mxu0
        %1192 = vmatpush.bf16.msra.mxu0 %v1132
        %1193 = vmatpush.bf16.msra.mxu0 %v1131
        %1194 = vmatpush.bf16.msra.mxu0 %v1130
        %1195 = vmatpush.bf16.msra.mxu0 %v1129
        %1196 = vmatpush.bf16.msra.mxu0 %v1128
        %1197 = vmatpush.bf16.msra.mxu0 %v1127
        %1198 = vmatpush.bf16.msra.mxu0 %v1126
        %1199 = vmatpush.bf16.msra.mxu0 %v1125
        %1200 = vmatmul.bf16.gmra.mxu0 %v1004
        %v1201 = vpop.f32.mrf.mxu0
        %v1202 = vadd.f32 %v1159, %v1201
        %v1203 = vpop.f32.mrf.mxu0
        %v1204 = vadd.f32 %v1161, %v1203
        %1205 = vmatmul.bf16.gmra.mxu0 %v1006
        %v1206 = vpop.f32.mrf.mxu0
        %v1207 = vadd.f32 %v1164, %v1206
        %v1208 = vpop.f32.mrf.mxu0
        %v1209 = vadd.f32 %v1166, %v1208
        %1210 = vmatmul.bf16.gmra.mxu0 %v1008
        %v1211 = vpop.f32.mrf.mxu0
        %v1212 = vadd.f32 %v1169, %v1211
        %v1213 = vpop.f32.mrf.mxu0
        %v1214 = vadd.f32 %v1171, %v1213
        %1215 = vmatmul.bf16.gmra.mxu0 %v1010
        %v1216 = vpop.f32.mrf.mxu0
        %v1217 = vadd.f32 %v1174, %v1216
        %v1218 = vpop.f32.mrf.mxu0
        %v1219 = vadd.f32 %v1176, %v1218
        %1220 = vmatmul.bf16.gmra.mxu0 %v1012
        %v1221 = vpop.f32.mrf.mxu0
        %v1222 = vadd.f32 %v1179, %v1221
        %v1223 = vpop.f32.mrf.mxu0
        %v1224 = vadd.f32 %v1181, %v1223
        %1225 = vmatmul.bf16.gmra.mxu0 %v1014
        %v1226 = vpop.f32.mrf.mxu0
        %v1227 = vadd.f32 %v1184, %v1226
        %v1228 = vpop.f32.mrf.mxu0
        %v1229 = vadd.f32 %v1186, %v1228
        %1230 = vmatmul.bf16.gmra.mxu0 %v1016
        %v1231 = vpop.f32.mrf.mxu0
        %v1232 = vadd.f32 %v1189, %v1231
        %v1233 = vpop.f32.mrf.mxu0
        %1234 = vdwg.mxu0
        %v1235 = vpack.c.bf16 %v1202, %v1202
        %v1236 = vpack.c.bf16 %v1204, %v1204
        %v1237 = vpack.c.bf16 %v1207, %v1207
        %v1238 = vpack.c.bf16 %v1209, %v1209
        %v1239 = vpack.c.bf16 %v1212, %v1212
        %v1240 = vpack.c.bf16 %v1214, %v1214
        %v1241 = vpack.c.bf16 %v1217, %v1217
        %v1242 = vpack.c.bf16 %v1219, %v1219
        %v1243 = vpack.c.bf16 %v1222, %v1222
        %v1244 = vpack.c.bf16 %v1224, %v1224
        %v1245 = vpack.c.bf16 %v1227, %v1227
        %v1246 = vpack.c.bf16 %v1229, %v1229
        %v1247 = vpack.c.bf16 %v1232, %v1232
        %1248 = vst [vmem:[%s290] sm:$0xf] %v1235
        %1249 = vst [vmem:[%s290 + $0x4] sm:$0xf] %v1236
        %1250 = vst [vmem:[%s290 + $0x8] sm:$0xf] %v1237
        %1251 = vst [vmem:[%s290 + $0xc] sm:$0xf] %v1238
        %1252 = vst [vmem:[%s290 + $0x10] sm:$0xf] %v1239
        %1253 = vst [vmem:[%s290 + $0x14] sm:$0xf] %v1240
        %1254 = vst [vmem:[%s290 + $0x18] sm:$0xf] %v1241
        %1255 = vst [vmem:[%s290 + $0x1c] sm:$0xf] %v1242
        %1256 = vst [vmem:[%s290 + $0x20] sm:$0xf] %v1243
        %1257 = vst [vmem:[%s290 + $0x24] sm:$0xf] %v1244
        %1258 = vst [vmem:[%s290 + $0x28] sm:$0xf] %v1245
        %1259 = vst [vmem:[%s290 + $0x2c] sm:$0xf] %v1246
        %1260 = vst [vmem:[%s290 + $0x30] sm:$0xf] %v1247
        %s1261 = sand.u32 %s186, 1
        %s1262 = scalar_lea.sflag [#allocation3], %s1261
        %s1263 = sand.u32 %s186, 1
        %s1264 = smul.addr %s1263, 52
        %s1265 = scalar_lea.vmem [#allocation2], %s1264
        // Predicated region
        $region49: #{tpu_custom_call.1} parent=47 // pred_check
          %p1266 = pneg %p196
        $region50: #{tpu_custom_call.1} parent=47 // pred_check_branch
          %1268 = sbr.rel (%p1266) target = $region52
        $region51: #{tpu_custom_call.1} parent=47 // pred_region
          %s1269 = smul.u32 13, %s21
          %1271 = vsyncadd %s1262, 0
          %s1272 = smul.addr %s1269, 4
          %s1273 = scalar_lea.hbm %s7, %s1272
          %s1274 = sshll.u32 %s1265, 4
          %s1275 = int_to_ptr.vmem [resolvable:$true] %s1274
          %s1276 = sshll.u32 %s1273, 4
          %s1277 = int_to_ptr.hbm [resolvable:$true] %s1276
          %1282 = dma.vmem_to_hbm [thread:$0]  %s1275, 832, %s1277, %s1262, 64, 64, 4
        $region52: #{tpu_custom_call.1} parent=47 // pred_fallthru
          _
      $region48: #{tpu_custom_call.1} parent=5 // pred_fallthru
        _
      %p1283 = scmp.le.s32.totalorder 2, %s16
      // Predicated region
      $region53: #{tpu_custom_call.1} parent=5 // pred_check
        %p1284 = pneg %p1283
      $region54: #{tpu_custom_call.1} parent=5 // pred_check_branch
        %1286 = sbr.rel (%p1284) target = $region56
      $region55: #{tpu_custom_call.1} parent=5 // pred_region
        %s1287 = ssub.s32 %s16, 2
        // Predicated region
        $region57: #{tpu_custom_call.1} parent=55 // pred_check
          %p1288 = pneg %p202
        $region58: #{tpu_custom_call.1} parent=55 // pred_check_branch
          %1290 = sbr.rel (%p1288) target = $region60
        $region59: #{tpu_custom_call.1} parent=55 // pred_region
          %s1291 = sand.u32 %s187, 1
          %s1292 = scalar_lea.sflag [#allocation3], %s1291
          %s1293 = sand.u32 %s187, 1
          %s1294 = smul.addr %s1293, 52
          %s1295 = scalar_lea.vmem [#allocation2], %s1294
          %1297 = dma.done %s1292, 832
        $region60: #{tpu_custom_call.1} parent=55 // pred_fallthru
          _
      $region56: #{tpu_custom_call.1} parent=5 // pred_fallthru
        _
    $region6: #{tpu_custom_call.1} parent=1 // loop_footer
      %s20 = sadd.s32 1, %s16
    $region7: #{tpu_custom_call.1} parent=1 // loop_footer_branch
      %15 = sbr.rel target = $region3
    $region8: #{tpu_custom_call.1} parent=1 // loop_exit
      _
    %1298 = vsyncpa [#allocation3], 1
    %s1299 = scalar_lea.sflag [#allocation3], 1
    %1300 = vsyncpa %s1299, 1

</llo_original>
